<compile_context>
chip_gen: v7x
topology: tpu7x:2x2x1
jax: 0.10.0
libtpu: 0.0.40
codegen_flags: <defaults>
</compile_context>

<pallas_src>
import functools

import jax
import jax.numpy as jnp
from jax import lax
from jax.experimental import pallas as pl
from jax.experimental.pallas import tpu as pltpu


def lstm_rnnbase_kernel(x_ref, wx_ref, wh_ref, bxh_ref, wo_ref, bo_ref,
                        out_ref, hid_ref, a_sc, b_sc, gx_sc):
    """One (t_blk, b_blk) chunk of the LSTM-style recurrence.

    x_ref   : (Tb, Bb, D)  time-major input chunk (f32)
    wx_ref  : (D, 4H)  wh_ref : (H, 4H)      -- compute dtype (bf16 or f32)
    bxh_ref : (1, 4H)  (= bx + bh, folded outside; f32)
    wo_ref  : (H, D)   bo_ref : (1, D)       -- f32
    out_ref : (Tb, Bb, D)  Linear(H, D) of the raw collected states
    hid_ref : (Tb, Bb, H)  raw states during the loop, tanh(raw) after epilogue
    a_sc/b_sc : (Bb, H) f32 carries ("hidden"/"cell" slots); persist across the
                time grid axis, reset at the first time chunk.
    gx_sc   : (Tb, Bb, 4H) precomputed input-projection gates (compute dtype).
    """
    Tb, Bb, D = x_ref.shape
    H = a_sc.shape[-1]
    mxu_dt = wx_ref.dtype

    # Carry reset.  NOTE: only correct because the time axis is the LAST
    # (innermost, sequentially iterated) grid dimension and is marked
    # "arbitrary".  Do not reorder the grid or mark time "parallel".
    @pl.when(pl.program_id(1) == 0)
    def _():
        a_sc[...] = jnp.zeros_like(a_sc)   # h0 = zeros
        b_sc[...] = jnp.zeros_like(b_sc)   # c0 = zeros

    # ---- Prologue: input projection for the whole chunk as one MXU matmul;
    # folded bias added once (loop-invariant); stored in the compute dtype.
    gx = jnp.dot(x_ref[...].reshape(Tb * Bb, D).astype(mxu_dt), wx_ref[...],
                 preferred_element_type=jnp.float32) + bxh_ref[...]
    gx_sc[...] = gx.reshape(Tb, Bb, 4 * H).astype(gx_sc.dtype)

    # Independent batch sub-tiles inside each step: their h@Wh matmuls / sigmoid
    # passes have no mutual dependency, so one sub-tile's MXU push can overlap
    # the other's result drain + EUP sigmoid (the true per-step latency chain).
    n_sub = 2 if Bb % 16 == 0 else 1
    sub = Bb // n_sub

    def one_step(t):
        for s in range(n_sub):
            lo = s * sub
            h_prev = a_sc[lo:lo + sub, :]
            c_prev = b_sc[lo:lo + sub, :]
            gates = gx_sc[t, lo:lo + sub, :].astype(jnp.float32) + jnp.dot(
                h_prev.astype(mxu_dt), wh_ref[...],
                preferred_element_type=jnp.float32)                  # (sub, 4H)
            sg = jax.nn.sigmoid(gates)      # single EUP pass over the whole tile
            i_t = sg[:, 0 * H:1 * H]
            f_t = sg[:, 1 * H:2 * H]
            g_t = sg[:, 2 * H:3 * H]        # sigmoid cell gate: intentional quirk
            o_t = sg[:, 3 * H:4 * H]
            cy = c_prev * f_t + i_t * g_t
            hy = o_t * jnp.tanh(cy)
            a_sc[lo:lo + sub, :] = cy       # (cy, hy) role swap: intentional quirk
            b_sc[lo:lo + sub, :] = hy
            hid_ref[t, lo:lo + sub, :] = cy  # raw state; tanh deferred to epilogue

    # Modest unroll only (LLO cross-step visibility); deeper unrolls risk vreg
    # spills -- the sub-tile interleave above is the preferred ILP source.
    unroll = 2 if Tb % 2 == 0 else 1

    def step(tt, carry):
        for u in range(unroll):
            one_step(tt * unroll + u)
        return carry

    lax.fori_loop(0, Tb // unroll, step, 0)

    # ---- Epilogue: one MXU matmul for the output projection from the raw
    # collected states, then tanh them in place (no separate cy scratch).
    raw = hid_ref[...]                                               # (Tb, Bb, H)
    out = jnp.dot(raw.reshape(Tb * Bb, H), wo_ref[...],
                  preferred_element_type=jnp.float32) + bo_ref[...]
    out_ref[...] = out.reshape(Tb, Bb, D)
    hid_ref[...] = jnp.tanh(raw)


def _vmem_capacity_bytes():
    try:
        return int(pltpu.get_tpu_info().vmem_capacity_bytes)
    except Exception:
        return 64 * 1024 * 1024   # v7x per-TensorCore VMEM -- the tightest case


def _vmem_bytes(t_blk, b_blk, D, H, gate_bytes, w_bytes):
    """Live-VMEM estimate: double-buffered I/O blocks + single-buffered weights
    + scratch (gx_sc dominates)."""
    g4 = 4 * H
    io = 2 * t_blk * b_blk * (D + D + H) * 4                   # x, out, hid blocks
    wts = (D * g4 + H * g4) * w_bytes + H * D * 4 + g4 * 4 + D * 4   # Buffered(1)
    scratch = t_blk * b_blk * g4 * gate_bytes + 2 * b_blk * H * 4
    return io + wts + scratch


def _pick_blocks(B, T, D, H, *, vmem_budget, gate_bytes, w_bytes):
    def cands(n):
        c = [d for d in range(8, n + 1, 8) if n % d == 0]
        return sorted(set(c)) if c else [n]

    b_cands = cands(B)
    # Largest batch block <= 256 (MXU M dim on v6e/v7x; >=128 also covers v5e)
    # that still leaves >= 2 batch grid blocks so v7x's two TensorCores both get
    # work; relax when the batch is too small.
    good = [b for b in b_cands if b <= 256 and B // b >= 2]
    if not good:
        good = [b for b in b_cands if b <= 256] or b_cands
    b_blk = max(good)

    t_cands = cands(T)
    fits = [t for t in t_cands
            if _vmem_bytes(t, b_blk, D, H, gate_bytes, w_bytes) <= vmem_budget]
    t_blk = max(fits) if fits else min(t_cands)
    return t_blk, b_blk


def rnnbase_forward(x_btd, params, *, t_blk=None, b_blk=None,
                    compute_dtype=jnp.bfloat16):
    """x_btd: (B, T, D) float32. Returns (out (B, T, D), hidden (B, T, H)).

    compute_dtype is the dtype of the MXU inputs (x, wx, wh) and of the gx_sc
    scratch; carries, gate accumulation and the output projection stay f32.
    """
    wx, bx, wh, bh, wo, bo = params
    B, T, D = x_btd.shape
    H = wh.shape[0]

    gate_bytes = jnp.dtype(compute_dtype).itemsize
    cap = _vmem_capacity_bytes()
    auto_t, auto_b = _pick_blocks(B, T, D, H, vmem_budget=int(0.6 * cap),
                                  gate_bytes=gate_bytes, w_bytes=gate_bytes)
    t_blk = auto_t if t_blk is None else t_blk
    b_blk = auto_b if b_blk is None else b_blk
    assert T % t_blk == 0 and B % b_blk == 0, "T/B must divide by the block sizes"

    est = _vmem_bytes(t_blk, b_blk, D, H, gate_bytes, gate_bytes)
    vmem_limit = int(min(cap, max(est + (16 << 20), 32 << 20)))

    bxh = (bx + bh).astype(jnp.float32)       # fold the two biases once, outside
    wx_c = wx.astype(compute_dtype)
    wh_c = wh.astype(compute_dtype)
    # TODO(synk): this XLA transpose of x (and the two output transposes below)
    # each cost one extra HBM pass; removing them needs time-major caller I/O or
    # an in-kernel 3-D relayout -- kept host-side for lowering portability.
    x_tbd = jnp.transpose(x_btd, (1, 0, 2)).astype(jnp.float32)      # (T, B, D)

    grid = (B // b_blk, T // t_blk)   # (batch [parallel], time [arbitrary/serial])

    out_tb, hid_tb = pl.pallas_call(
        lstm_rnnbase_kernel,
        out_shape=(jax.ShapeDtypeStruct((T, B, D), jnp.float32),
                   jax.ShapeDtypeStruct((T, B, H), jnp.float32)),
        grid_spec=pltpu.PrefetchScalarGridSpec(
            num_scalar_prefetch=0,
            grid=grid,
            in_specs=[
                pl.BlockSpec((t_blk, b_blk, D), lambda b, t: (t, b, 0)),      # x
                pl.BlockSpec((D, 4 * H), lambda b, t: (0, 0),
                             pipeline_mode=pl.Buffered(1)),                   # wx
                pl.BlockSpec((H, 4 * H), lambda b, t: (0, 0),
                             pipeline_mode=pl.Buffered(1)),                   # wh
                pl.BlockSpec((1, 4 * H), lambda b, t: (0, 0),
                             pipeline_mode=pl.Buffered(1)),                   # bx+bh
                pl.BlockSpec((H, D), lambda b, t: (0, 0),
                             pipeline_mode=pl.Buffered(1)),                   # wo
                pl.BlockSpec((1, D), lambda b, t: (0, 0),
                             pipeline_mode=pl.Buffered(1)),                   # bo
            ],
            out_specs=(
                pl.BlockSpec((t_blk, b_blk, D), lambda b, t: (t, b, 0)),      # out
                pl.BlockSpec((t_blk, b_blk, H), lambda b, t: (t, b, 0)),      # hidden
            ),
            scratch_shapes=[
                pltpu.VMEM((b_blk, H), jnp.float32),              # a_sc ("hidden")
                pltpu.VMEM((b_blk, H), jnp.float32),              # b_sc ("cell")
                pltpu.VMEM((t_blk, b_blk, 4 * H), compute_dtype),  # gx_sc
            ],
        ),
        compiler_params=pltpu.CompilerParams(
            # Time MUST stay the last grid axis and "arbitrary": the carry reset
            # at program_id(1) == 0 relies on sequential innermost iteration.
            dimension_semantics=("parallel", "arbitrary"),
            vmem_limit_bytes=vmem_limit),
    )(x_tbd, wx_c, wh_c, bxh, wo, bo)

    out = jnp.transpose(out_tb, (1, 0, 2))   # (B, T, D)
    hid = jnp.transpose(hid_tb, (1, 0, 2))   # (B, T, H)
    return out, hid


def _xavier_uniform(key, fan_in, fan_out):
    # matches nn.init.xavier_uniform_ (gain=1.0); stored transposed: (fan_in, fan_out)
    bound = jnp.sqrt(6.0 / (fan_in + fan_out))
    return jax.random.uniform(key, (fan_in, fan_out), jnp.float32, -bound, bound)


def make_params(key, input_dim, hidden_size):
    """x2h: Linear(D, 4H), h2h: Linear(H, 4H), out: Linear(H, D); 1-D params
    zeroed exactly as RNNBase.__init__ does."""
    k1, k2, k3 = jax.random.split(key, 3)
    H, D = hidden_size, input_dim
    wx = _xavier_uniform(k1, D, 4 * H)
    bx = jnp.zeros((1, 4 * H), jnp.float32)
    wh = _xavier_uniform(k2, H, 4 * H)
    bh = jnp.zeros((1, 4 * H), jnp.float32)
    wo = _xavier_uniform(k3, H, D)
    bo = jnp.zeros((1, D), jnp.float32)
    return wx, bx, wh, bh, wo, bo


def reference_forward(x_btd, params):
    """Pure-JAX re-implementation of the (intended) PyTorch forward, for checking."""
    wx, bx, wh, bh, wo, bo = params
    B, T, D = x_btd.shape
    H = wh.shape[0]
    a = jnp.zeros((B, H), jnp.float32)   # "hidden" slot
    b = jnp.zeros((B, H), jnp.float32)   # "cell" slot
    hids = []
    for t in range(T):
        gates = x_btd[:, t] @ wx + bx + a @ wh + bh
        i, f, g, o = jnp.split(gates, 4, axis=1)
        i, f, g, o = (jax.nn.sigmoid(i), jax.nn.sigmoid(f),
                      jax.nn.sigmoid(g), jax.nn.sigmoid(o))
        cy = b * f + i * g
        hy = o * jnp.tanh(cy)
        a, b = cy, hy
        hids.append(cy)
    hid_raw = jnp.stack(hids, axis=1)                # (B, T, H)
    out = hid_raw @ wo + bo                          # (B, T, D)
    return out, jnp.tanh(hid_raw)


if __name__ == "__main__":
    # Small shapes; the f32 run forces a (2, 2) grid (two batch blocks x two
    # time chunks) to exercise the cross-chunk carry path and the >=2-batch-block
    # (megacore-friendly) layout.  The bf16 run uses the VMEM-budgeted auto tiles.
    B, T, D, H = 16, 16, 8, 32

    key = jax.random.PRNGKey(0)
    kx, kp = jax.random.split(key)
    x = jax.random.normal(kx, (B, T, D), jnp.float32)
    params = make_params(kp, D, H)

    out_want, hid_want = reference_forward(x, params)

    # 1) exact-parity config: f32 everywhere, explicit small blocks -> (2, 2) grid.
    fwd_f32 = jax.jit(functools.partial(rnnbase_forward, t_blk=8, b_blk=8,
                                        compute_dtype=jnp.float32))
    out32, hid32 = fwd_f32(x, params)
    jax.block_until_ready((out32, hid32))
    assert out32.shape == (B, T, D) and hid32.shape == (B, T, H)
    assert jnp.allclose(out32, out_want, rtol=1e-3, atol=1e-3), "f32 out mismatch"
    assert jnp.allclose(hid32, hid_want, rtol=1e-3, atol=1e-3), "f32 hid mismatch"

    # 2) performance config: bf16 MXU inputs + bf16 gx scratch (f32 carries/acc),
    #    VMEM-budgeted auto block sizes.
    fwd_fast = jax.jit(rnnbase_forward)
    out16, hid16 = fwd_fast(x, params)
    jax.block_until_ready((out16, hid16))
    assert out16.shape == (B, T, D) and hid16.shape == (B, T, H)
    assert jnp.allclose(out16, out_want, rtol=3e-2, atol=3e-2), "bf16 out mismatch"
    assert jnp.allclose(hid16, hid_want, rtol=3e-2, atol=3e-2), "bf16 hid mismatch"

    print("KERNEL_OK")
</pallas_src>

<mosaic_0001>
module attributes {stable_mosaic.version = 11 : i64} {
  func.func @lstm_rnnbase_kernel(%arg0: i32, %arg1: i32, %arg2: memref<8x8x8xf32, #tpu.memory_space<vmem>>, %arg3: memref<8x128xf32, #tpu.memory_space<vmem>>, %arg4: memref<32x128xf32, #tpu.memory_space<vmem>>, %arg5: memref<1x128xf32, #tpu.memory_space<vmem>>, %arg6: memref<32x8xf32, #tpu.memory_space<vmem>>, %arg7: memref<1x8xf32, #tpu.memory_space<vmem>>, %arg8: memref<8x8x8xf32, #tpu.memory_space<vmem>>, %arg9: memref<8x8x32xf32, #tpu.memory_space<vmem>>, %arg10: memref<8x32xf32, #tpu.memory_space<vmem>>, %arg11: memref<8x32xf32, #tpu.memory_space<vmem>>, %arg12: memref<8x8x128xf32, #tpu.memory_space<vmem>>) attributes {dimension_semantics = [#tpu.dimension_semantics<parallel>, #tpu.dimension_semantics<arbitrary>], iteration_bounds = array<i64: 2, 2>, scalar_prefetch = 0 : i64, scratch_operands = 3 : i64, tpu.core_type = #tpu.core_type<tc>, window_params = [{transform_indices = @transform_0, window_bounds = array<i64: 8, 8, 8>}, {pipeline_mode = #tpu.pipeline_mode<synchronous>, transform_indices = @transform_1, window_bounds = array<i64: 8, 128>}, {pipeline_mode = #tpu.pipeline_mode<synchronous>, transform_indices = @transform_2, window_bounds = array<i64: 32, 128>}, {pipeline_mode = #tpu.pipeline_mode<synchronous>, transform_indices = @transform_3, window_bounds = array<i64: 1, 128>}, {pipeline_mode = #tpu.pipeline_mode<synchronous>, transform_indices = @transform_4, window_bounds = array<i64: 32, 8>}, {pipeline_mode = #tpu.pipeline_mode<synchronous>, transform_indices = @transform_5, window_bounds = array<i64: 1, 8>}, {transform_indices = @transform_6, window_bounds = array<i64: 8, 8, 8>}, {transform_indices = @transform_7, window_bounds = array<i64: 8, 8, 32>}]} {
    %c0_i32 = arith.constant 0 : i32
    %0 = arith.cmpi eq, %arg1, %c0_i32 : i32
    %1 = arith.extui %0 : i1 to i32
    %c0_i32_0 = arith.constant 0 : i32
    %2 = arith.cmpi ne, %1, %c0_i32_0 : i32
    scf.if %2 {
      %cst_26 = arith.constant 0.000000e+00 : f32
      %24 = vector.broadcast %cst_26 : f32 to vector<8x32xf32>
      %c0_27 = arith.constant 0 : index
      %c0_28 = arith.constant 0 : index
      %25 = vector.load %arg10[%c0_27, %c0_28] : memref<8x32xf32, #tpu.memory_space<vmem>>, vector<8x32xf32>
      tpu.vector_store %arg10[%c0_27, %c0_28], %24 {strides = array<i32>} : memref<8x32xf32, #tpu.memory_space<vmem>>, vector<8x32xf32>,
      %cst_29 = arith.constant 0.000000e+00 : f32
      %26 = vector.broadcast %cst_29 : f32 to vector<8x32xf32>
      %c0_30 = arith.constant 0 : index
      %c0_31 = arith.constant 0 : index
      %27 = vector.load %arg11[%c0_30, %c0_31] : memref<8x32xf32, #tpu.memory_space<vmem>>, vector<8x32xf32>
      tpu.vector_store %arg11[%c0_30, %c0_31], %26 {strides = array<i32>} : memref<8x32xf32, #tpu.memory_space<vmem>>, vector<8x32xf32>,
    } else {
    }
    %c0 = arith.constant 0 : index
    %c0_1 = arith.constant 0 : index
    %c0_2 = arith.constant 0 : index
    %3 = vector.load %arg2[%c0, %c0_1, %c0_2] : memref<8x8x8xf32, #tpu.memory_space<vmem>>, vector<8x8x8xf32>
    %4 = vector.shape_cast %3 : vector<8x8x8xf32> to vector<64x8xf32>
    %c0_3 = arith.constant 0 : index
    %c0_4 = arith.constant 0 : index
    %5 = vector.load %arg3[%c0_3, %c0_4] : memref<8x128xf32, #tpu.memory_space<vmem>>, vector<8x128xf32>
    %cst = arith.constant dense<0.000000e+00> : vector<64x128xf32>
    %6 = tpu.matmul %4, %5, %cst {dimension_numbers = #tpu.dot_dimension_numbers<[1], [0], [0], [1], [0, 0, 1, 1], [], []>} : vector<64x8xf32>, vector<8x128xf32>, vector<64x128xf32> -> vector<64x128xf32>
    %c0_5 = arith.constant 0 : index
    %c0_6 = arith.constant 0 : index
    %7 = vector.load %arg5[%c0_5, %c0_6] : memref<1x128xf32, #tpu.memory_space<vmem>>, vector<1x128xf32>
    %8 = vector.broadcast %7 : vector<1x128xf32> to vector<64x128xf32>
    %9 = arith.addf %6, %8 : vector<64x128xf32>
    %10 = vector.shape_cast %9 : vector<64x128xf32> to vector<8x8x128xf32>
    %c0_7 = arith.constant 0 : index
    %c0_8 = arith.constant 0 : index
    %c0_9 = arith.constant 0 : index
    %11 = vector.load %arg12[%c0_7, %c0_8, %c0_9] : memref<8x8x128xf32, #tpu.memory_space<vmem>>, vector<8x8x128xf32>
    tpu.vector_store %arg12[%c0_7, %c0_8, %c0_9], %10 {strides = array<i32>} : memref<8x8x128xf32, #tpu.memory_space<vmem>>, vector<8x8x128xf32>,
    %c0_i32_10 = arith.constant 0 : i32
    %c4_i32 = arith.constant 4 : i32
    %12 = arith.addi %c0_i32_10, %c4_i32 : i32
    %c1_i32 = arith.constant 1 : i32
    scf.for %arg13 = %c0_i32_10 to %12 step %c1_i32  : i32 {
      %c2_i32 = arith.constant 2 : i32
      %24 = arith.muli %arg13, %c2_i32 : i32
      %c0_i32_26 = arith.constant 0 : i32
      %25 = arith.addi %24, %c0_i32_26 : i32
      %c0_27 = arith.constant 0 : index
      %c0_28 = arith.constant 0 : index
      %26 = vector.load %arg10[%c0_27, %c0_28] : memref<8x32xf32, #tpu.memory_space<vmem>>, vector<8x32xf32>
      %c0_29 = arith.constant 0 : index
      %c0_30 = arith.constant 0 : index
      %27 = vector.load %arg11[%c0_29, %c0_30] : memref<8x32xf32, #tpu.memory_space<vmem>>, vector<8x32xf32>
      %28 = arith.index_cast %25 : i32 to index
      %c0_31 = arith.constant 0 : index
      %c0_32 = arith.constant 0 : index
      %29 = vector.load %arg12[%28, %c0_31, %c0_32] : memref<8x8x128xf32, #tpu.memory_space<vmem>>, vector<1x8x128xf32>
      %30 = vector.shape_cast %29 : vector<1x8x128xf32> to vector<8x128xf32>
      %c0_33 = arith.constant 0 : index
      %c0_34 = arith.constant 0 : index
      %31 = vector.load %arg4[%c0_33, %c0_34] : memref<32x128xf32, #tpu.memory_space<vmem>>, vector<32x128xf32>
      %cst_35 = arith.constant dense<0.000000e+00> : vector<8x128xf32>
      %32 = tpu.matmul %26, %31, %cst_35 {dimension_numbers = #tpu.dot_dimension_numbers<[1], [0], [0], [1], [0, 0, 1, 1], [], []>} : vector<8x32xf32>, vector<32x128xf32>, vector<8x128xf32> -> vector<8x128xf32>
      %33 = arith.addf %30, %32 : vector<8x128xf32>
      %34 = arith.negf %33 : vector<8x128xf32>
      %35 = math.exp %34 : vector<8x128xf32>
      %cst_36 = arith.constant 1.000000e+00 : f32
      %36 = vector.broadcast %cst_36 : f32 to vector<8x128xf32>
      %37 = arith.addf %36, %35 : vector<8x128xf32>
      %38 = arith.divf %36, %37 : vector<8x128xf32>
      %39 = vector.extract_strided_slice %38 {offsets = [0, 0], sizes = [8, 32], strides = [1, 1]} : vector<8x128xf32> to vector<8x32xf32>
      %40 = vector.extract_strided_slice %38 {offsets = [0, 32], sizes = [8, 32], strides = [1, 1]} : vector<8x128xf32> to vector<8x32xf32>
      %41 = vector.extract_strided_slice %38 {offsets = [0, 64], sizes = [8, 32], strides = [1, 1]} : vector<8x128xf32> to vector<8x32xf32>
      %42 = vector.extract_strided_slice %38 {offsets = [0, 96], sizes = [8, 32], strides = [1, 1]} : vector<8x128xf32> to vector<8x32xf32>
      %43 = arith.mulf %27, %40 : vector<8x32xf32>
      %44 = arith.mulf %39, %41 : vector<8x32xf32>
      %45 = arith.addf %43, %44 : vector<8x32xf32>
      %46 = math.tanh %45 : vector<8x32xf32>
      %47 = arith.mulf %42, %46 : vector<8x32xf32>
      %c0_37 = arith.constant 0 : index
      %c0_38 = arith.constant 0 : index
      %48 = vector.load %arg10[%c0_37, %c0_38] : memref<8x32xf32, #tpu.memory_space<vmem>>, vector<8x32xf32>
      tpu.vector_store %arg10[%c0_37, %c0_38], %45 {strides = array<i32>} : memref<8x32xf32, #tpu.memory_space<vmem>>, vector<8x32xf32>,
      %c0_39 = arith.constant 0 : index
      %c0_40 = arith.constant 0 : index
      %49 = vector.load %arg11[%c0_39, %c0_40] : memref<8x32xf32, #tpu.memory_space<vmem>>, vector<8x32xf32>
      tpu.vector_store %arg11[%c0_39, %c0_40], %47 {strides = array<i32>} : memref<8x32xf32, #tpu.memory_space<vmem>>, vector<8x32xf32>,
      %50 = arith.index_cast %25 : i32 to index
      %c0_41 = arith.constant 0 : index
      %c0_42 = arith.constant 0 : index
      %51 = vector.load %arg9[%50, %c0_41, %c0_42] : memref<8x8x32xf32, #tpu.memory_space<vmem>>, vector<1x8x32xf32>
      %52 = vector.shape_cast %51 : vector<1x8x32xf32> to vector<8x32xf32>
      %53 = vector.shape_cast %45 : vector<8x32xf32> to vector<1x8x32xf32>
      tpu.vector_store %arg9[%50, %c0_41, %c0_42], %53 {strides = array<i32>} : memref<8x8x32xf32, #tpu.memory_space<vmem>>, vector<1x8x32xf32>,
      %c2_i32_43 = arith.constant 2 : i32
      %54 = arith.muli %arg13, %c2_i32_43 : i32
      %c1_i32_44 = arith.constant 1 : i32
      %55 = arith.addi %54, %c1_i32_44 : i32
      %c0_45 = arith.constant 0 : index
      %c0_46 = arith.constant 0 : index
      %56 = vector.load %arg10[%c0_45, %c0_46] : memref<8x32xf32, #tpu.memory_space<vmem>>, vector<8x32xf32>
      %c0_47 = arith.constant 0 : index
      %c0_48 = arith.constant 0 : index
      %57 = vector.load %arg11[%c0_47, %c0_48] : memref<8x32xf32, #tpu.memory_space<vmem>>, vector<8x32xf32>
      %58 = arith.index_cast %55 : i32 to index
      %c0_49 = arith.constant 0 : index
      %c0_50 = arith.constant 0 : index
      %59 = vector.load %arg12[%58, %c0_49, %c0_50] : memref<8x8x128xf32, #tpu.memory_space<vmem>>, vector<1x8x128xf32>
      %60 = vector.shape_cast %59 : vector<1x8x128xf32> to vector<8x128xf32>
      %c0_51 = arith.constant 0 : index
      %c0_52 = arith.constant 0 : index
      %61 = vector.load %arg4[%c0_51, %c0_52] : memref<32x128xf32, #tpu.memory_space<vmem>>, vector<32x128xf32>
      %cst_53 = arith.constant dense<0.000000e+00> : vector<8x128xf32>
      %62 = tpu.matmul %56, %61, %cst_53 {dimension_numbers = #tpu.dot_dimension_numbers<[1], [0], [0], [1], [0, 0, 1, 1], [], []>} : vector<8x32xf32>, vector<32x128xf32>, vector<8x128xf32> -> vector<8x128xf32>
      %63 = arith.addf %60, %62 : vector<8x128xf32>
      %64 = arith.negf %63 : vector<8x128xf32>
      %65 = math.exp %64 : vector<8x128xf32>
      %cst_54 = arith.constant 1.000000e+00 : f32
      %66 = vector.broadcast %cst_54 : f32 to vector<8x128xf32>
      %67 = arith.addf %66, %65 : vector<8x128xf32>
      %68 = arith.divf %66, %67 : vector<8x128xf32>
      %69 = vector.extract_strided_slice %68 {offsets = [0, 0], sizes = [8, 32], strides = [1, 1]} : vector<8x128xf32> to vector<8x32xf32>
      %70 = vector.extract_strided_slice %68 {offsets = [0, 32], sizes = [8, 32], strides = [1, 1]} : vector<8x128xf32> to vector<8x32xf32>
      %71 = vector.extract_strided_slice %68 {offsets = [0, 64], sizes = [8, 32], strides = [1, 1]} : vector<8x128xf32> to vector<8x32xf32>
      %72 = vector.extract_strided_slice %68 {offsets = [0, 96], sizes = [8, 32], strides = [1, 1]} : vector<8x128xf32> to vector<8x32xf32>
      %73 = arith.mulf %57, %70 : vector<8x32xf32>
      %74 = arith.mulf %69, %71 : vector<8x32xf32>
      %75 = arith.addf %73, %74 : vector<8x32xf32>
      %76 = math.tanh %75 : vector<8x32xf32>
      %77 = arith.mulf %72, %76 : vector<8x32xf32>
      %c0_55 = arith.constant 0 : index
      %c0_56 = arith.constant 0 : index
      %78 = vector.load %arg10[%c0_55, %c0_56] : memref<8x32xf32, #tpu.memory_space<vmem>>, vector<8x32xf32>
      tpu.vector_store %arg10[%c0_55, %c0_56], %75 {strides = array<i32>} : memref<8x32xf32, #tpu.memory_space<vmem>>, vector<8x32xf32>,
      %c0_57 = arith.constant 0 : index
      %c0_58 = arith.constant 0 : index
      %79 = vector.load %arg11[%c0_57, %c0_58] : memref<8x32xf32, #tpu.memory_space<vmem>>, vector<8x32xf32>
      tpu.vector_store %arg11[%c0_57, %c0_58], %77 {strides = array<i32>} : memref<8x32xf32, #tpu.memory_space<vmem>>, vector<8x32xf32>,
      %80 = arith.index_cast %55 : i32 to index
      %c0_59 = arith.constant 0 : index
      %c0_60 = arith.constant 0 : index
      %81 = vector.load %arg9[%80, %c0_59, %c0_60] : memref<8x8x32xf32, #tpu.memory_space<vmem>>, vector<1x8x32xf32>
      %82 = vector.shape_cast %81 : vector<1x8x32xf32> to vector<8x32xf32>
      %83 = vector.shape_cast %75 : vector<8x32xf32> to vector<1x8x32xf32>
      tpu.vector_store %arg9[%80, %c0_59, %c0_60], %83 {strides = array<i32>} : memref<8x8x32xf32, #tpu.memory_space<vmem>>, vector<1x8x32xf32>,
    }
    %c4_i32_11 = arith.constant 4 : i32
    %c0_12 = arith.constant 0 : index
    %c0_13 = arith.constant 0 : index
    %c0_14 = arith.constant 0 : index
    %13 = vector.load %arg9[%c0_12, %c0_13, %c0_14] : memref<8x8x32xf32, #tpu.memory_space<vmem>>, vector<8x8x32xf32>
    %14 = vector.shape_cast %13 : vector<8x8x32xf32> to vector<64x32xf32>
    %c0_15 = arith.constant 0 : index
    %c0_16 = arith.constant 0 : index
    %15 = vector.load %arg6[%c0_15, %c0_16] : memref<32x8xf32, #tpu.memory_space<vmem>>, vector<32x8xf32>
    %cst_17 = arith.constant dense<0.000000e+00> : vector<64x8xf32>
    %16 = tpu.matmul %14, %15, %cst_17 {dimension_numbers = #tpu.dot_dimension_numbers<[1], [0], [0], [1], [0, 0, 1, 1], [], []>} : vector<64x32xf32>, vector<32x8xf32>, vector<64x8xf32> -> vector<64x8xf32>
    %c0_18 = arith.constant 0 : index
    %c0_19 = arith.constant 0 : index
    %17 = vector.load %arg7[%c0_18, %c0_19] : memref<1x8xf32, #tpu.memory_space<vmem>>, vector<1x8xf32>
    %18 = vector.broadcast %17 : vector<1x8xf32> to vector<64x8xf32>
    %19 = arith.addf %16, %18 : vector<64x8xf32>
    %20 = vector.shape_cast %19 : vector<64x8xf32> to vector<8x8x8xf32>
    %c0_20 = arith.constant 0 : index
    %c0_21 = arith.constant 0 : index
    %c0_22 = arith.constant 0 : index
    %21 = vector.load %arg8[%c0_20, %c0_21, %c0_22] : memref<8x8x8xf32, #tpu.memory_space<vmem>>, vector<8x8x8xf32>
    tpu.vector_store %arg8[%c0_20, %c0_21, %c0_22], %20 {strides = array<i32>} : memref<8x8x8xf32, #tpu.memory_space<vmem>>, vector<8x8x8xf32>,
    %22 = math.tanh %13 : vector<8x8x32xf32>
    %c0_23 = arith.constant 0 : index
    %c0_24 = arith.constant 0 : index
    %c0_25 = arith.constant 0 : index
    %23 = vector.load %arg9[%c0_23, %c0_24, %c0_25] : memref<8x8x32xf32, #tpu.memory_space<vmem>>, vector<8x8x32xf32>
    tpu.vector_store %arg9[%c0_23, %c0_24, %c0_25], %22 {strides = array<i32>} : memref<8x8x32xf32, #tpu.memory_space<vmem>>, vector<8x8x32xf32>,
    return
  }
  func.func @transform_0(%arg0: i32, %arg1: i32) -> (i32, i32, i32) {
    %c0_i32 = arith.constant 0 : i32
    %c0_i32_0 = arith.constant 0 : i32
    return %arg1, %arg0, %c0_i32 : i32, i32, i32
  }
  func.func @transform_1(%arg0: i32, %arg1: i32) -> (i32, i32) {
    %c0_i32 = arith.constant 0 : i32
    %c0_i32_0 = arith.constant 0 : i32
    %c0_i32_1 = arith.constant 0 : i32
    return %c0_i32, %c0_i32_0 : i32, i32
  }
  func.func @transform_2(%arg0: i32, %arg1: i32) -> (i32, i32) {
    %c0_i32 = arith.constant 0 : i32
    %c0_i32_0 = arith.constant 0 : i32
    %c0_i32_1 = arith.constant 0 : i32
    return %c0_i32, %c0_i32_0 : i32, i32
  }
  func.func @transform_3(%arg0: i32, %arg1: i32) -> (i32, i32) {
    %c0_i32 = arith.constant 0 : i32
    %c0_i32_0 = arith.constant 0 : i32
    %c0_i32_1 = arith.constant 0 : i32
    return %c0_i32, %c0_i32_0 : i32, i32
  }
  func.func @transform_4(%arg0: i32, %arg1: i32) -> (i32, i32) {
    %c0_i32 = arith.constant 0 : i32
    %c0_i32_0 = arith.constant 0 : i32
    %c0_i32_1 = arith.constant 0 : i32
    return %c0_i32, %c0_i32_0 : i32, i32
  }
  func.func @transform_5(%arg0: i32, %arg1: i32) -> (i32, i32) {
    %c0_i32 = arith.constant 0 : i32
    %c0_i32_0 = arith.constant 0 : i32
    %c0_i32_1 = arith.constant 0 : i32
    return %c0_i32, %c0_i32_0 : i32, i32
  }
  func.func @transform_6(%arg0: i32, %arg1: i32) -> (i32, i32, i32) {
    %c0_i32 = arith.constant 0 : i32
    %c0_i32_0 = arith.constant 0 : i32
    return %arg1, %arg0, %c0_i32 : i32, i32, i32
  }
  func.func @transform_7(%arg0: i32, %arg1: i32) -> (i32, i32, i32) {
    %c0_i32 = arith.constant 0 : i32
    %c0_i32_0 = arith.constant 0 : i32
    return %arg1, %arg0, %c0_i32 : i32, i32, i32
  }
}

</mosaic_0001>

<llo_original>
// kernel: rnnbase_forward.1
$region0: #{rnnbase_forward.1}
  #allocation0 [shape = 'u32[]', space=smem, size = 0x4, offset = 0x4, fixed_abs, tag = 'smem constant byte address 0x4 - core index']
  #allocation1 [shape = 'u32[144,128]{1,0:T(1,128)}', space=vmem, size = 0x12000, scoped, tag = 'internal scratch']
  #allocation2 [shape = 'f32[8,32]{1,0:T(8,128)}', space=vmem, size = 0x1000, scoped, tag = 'scratch operand']
  #allocation3 [shape = 'f32[8,32]{1,0:T(8,128)}', space=vmem, size = 0x1000, scoped, tag = 'scratch operand']
  #allocation4 [shape = 'f32[8,8,128]{2,1,0:T(8,128)}', space=vmem, size = 0x8000, scoped, tag = 'scratch operand']
  %s0 = inlined_call_operand.vmem [shape: f32[16,16,8], index: 0, kind: input, shape index: {}]
  %s1 = inlined_call_operand.vmem [shape: f32[8,128], index: 1, kind: input, shape index: {}]
  %s2 = inlined_call_operand.vmem [shape: f32[32,128], index: 2, kind: input, shape index: {}]
  %s3 = inlined_call_operand.vmem [shape: f32[1,128], index: 3, kind: input, shape index: {}]
  %s4 = inlined_call_operand.vmem [shape: f32[32,8], index: 4, kind: input, shape index: {}]
  %s5 = inlined_call_operand.vmem [shape: f32[1,8], index: 5, kind: input, shape index: {}]
  %s6 = inlined_call_operand.vmem [shape: f32[16,16,8], index: 6, kind: output, shape index: {0}]
  %s7 = inlined_call_operand.vmem [shape: f32[16,16,32], index: 7, kind: output, shape index: {1}]
  %8 = xla_tuple %s6, %s7
  %s9 = sld [smem:[#allocation0]]
  $region182: #{rnnbase_forward.1} parent=0
    _
  %s11 = ssub.s32 1, %s9
  %s12 = scalar_select 0, %s11, %s9
  $region1: #{rnnbase_forward.1} parent=0
    #allocation5 [shape = 'u8[65536]{0}', space=vmem, size = 0x10000, scoped, tag = 'input window, operand 0']
    #allocation6 [shape = 'u8[65536]{0}', space=vmem, size = 0x10000, scoped, tag = 'output window, operand 0']
    #allocation7 [shape = 'u8[65536]{0}', space=vmem, size = 0x10000, scoped, tag = 'output window, operand 1']
    loop: start=0, step=1, limit=6
    $region2: #{rnnbase_forward.1} parent=1 // loop_pre_header
      _
    $region3: #{rnnbase_forward.1} parent=1 // loop_header
      %s14 = sphi 0, %s18
      %p15 = scmp.ge.s32.totalorder %s14, 6
      %s21 = sphi 0, %s33
      %s22 = sphi 0, %s29
      %s23 = sphi 0, %s21
      %s24 = sphi 0, %s22
      %s25 = sphi 0, %s23
      %s26 = sphi 0, %s24
      %s38 = sphi 0, %s40
      %s41 = sphi 0, %s38
      %s42 = sphi 0, %s41
      %s58 = sphi 0, %s42
      %s62 = sphi 0, %s62
      %s64 = sphi 0, %s62
      %s65 = sphi 0, %s64
      %s79 = sphi 0, %s65
      %s83 = sphi 0, %s83
      %s85 = sphi 0, %s83
      %s86 = sphi 0, %s85
      %s100 = sphi 0, %s86
      %s104 = sphi 0, %s104
      %s106 = sphi 0, %s104
      %s107 = sphi 0, %s106
      %s121 = sphi 0, %s107
      %s125 = sphi 0, %s125
      %s127 = sphi 0, %s125
      %s128 = sphi 0, %s127
      %s142 = sphi 0, %s128
      %s146 = sphi 0, %s146
      %s148 = sphi 0, %s146
      %s149 = sphi 0, %s148
      %s163 = sphi 0, %s149
      %s171 = sphi 0, %s173
      %s174 = sphi 0, %s171
      %s175 = sphi 0, %s174
      %s191 = sphi 0, %s175
      %s199 = sphi 0, %s201
      %s202 = sphi 0, %s199
      %s203 = sphi 0, %s202
      %s219 = sphi 0, %s203
    $region4: #{rnnbase_forward.1} parent=1 // loop_header_branch
      %17 = sbr.rel (%p15) target = $region8
    $region5: #{rnnbase_forward.1} parent=1 // loop_body
      %s19 = ssub.s32 %s14, 1
      %s20 = ssub.s32 %s14, 2
      %s27 = sadd.s32 1, %s22
      %p28 = scmp.ge.s32.totalorder %s27, 2
      %s29 = scalar_select %p28, 0, %s27
      %s30 = sadd.s32 1, %s21
      %s31 = scalar_select %p28, %s30, %s21
      %p32 = scmp.ge.s32.totalorder %s31, 2
      %s33 = scalar_select %p32, 0, %s31
      %s34 = ssub.s32 %s22, %s29
      %s35 = ssub.s32 %s21, %s33
      %s36 = sor.u32 %s34, %s35
      %p37 = scmp.eq.s32.totalorder %s36, 0
      %s39 = sadd.s32 %s38, 1
      %s40 = scalar_select %p37, %s38, %s39
      %p43 = pneg %p37
      %p44 = scmp.eq.s32.totalorder %s14, 3
      %p45 = por %p43, %p44
      %p46 = scmp.ne.s32.totalorder %s38, %s41
      %p47 = scmp.eq.s32.totalorder %s14, 0
      %p48 = por %p46, %p47
      %p49 = scmp.ne.s32.totalorder %s38, %s41
      %p50 = scmp.eq.s32.totalorder %s19, 3
      %p51 = por %p49, %p50
      %p52 = scmp.ne.s32.totalorder %s41, %s42
      %p53 = scmp.eq.s32.totalorder %s19, 0
      %p54 = por %p52, %p53
      %p55 = scmp.ne.s32.totalorder %s41, %s42
      %p56 = scmp.eq.s32.totalorder %s20, 3
      %p57 = por %p55, %p56
      %p59 = scmp.ne.s32.totalorder %s42, %s58
      %p60 = scmp.eq.s32.totalorder %s20, 0
      %p61 = por %p59, %p60
      %s63 = sadd.s32 %s62, 1
      %p66 = scmp.eq.s32.totalorder %s14, 3
      %p67 = scmp.ne.s32.totalorder %s62, %s64
      %p68 = scmp.eq.s32.totalorder %s14, 0
      %p69 = por %p67, %p68
      %p70 = scmp.ne.s32.totalorder %s62, %s64
      %p71 = scmp.eq.s32.totalorder %s19, 3
      %p72 = por %p70, %p71
      %p73 = scmp.ne.s32.totalorder %s64, %s65
      %p74 = scmp.eq.s32.totalorder %s19, 0
      %p75 = por %p73, %p74
      %p76 = scmp.ne.s32.totalorder %s64, %s65
      %p77 = scmp.eq.s32.totalorder %s20, 3
      %p78 = por %p76, %p77
      %p80 = scmp.ne.s32.totalorder %s65, %s79
      %p81 = scmp.eq.s32.totalorder %s20, 0
      %p82 = por %p80, %p81
      %s84 = sadd.s32 %s83, 1
      %p87 = scmp.eq.s32.totalorder %s14, 3
      %p88 = scmp.ne.s32.totalorder %s83, %s85
      %p89 = scmp.eq.s32.totalorder %s14, 0
      %p90 = por %p88, %p89
      %p91 = scmp.ne.s32.totalorder %s83, %s85
      %p92 = scmp.eq.s32.totalorder %s19, 3
      %p93 = por %p91, %p92
      %p94 = scmp.ne.s32.totalorder %s85, %s86
      %p95 = scmp.eq.s32.totalorder %s19, 0
      %p96 = por %p94, %p95
      %p97 = scmp.ne.s32.totalorder %s85, %s86
      %p98 = scmp.eq.s32.totalorder %s20, 3
      %p99 = por %p97, %p98
      %p101 = scmp.ne.s32.totalorder %s86, %s100
      %p102 = scmp.eq.s32.totalorder %s20, 0
      %p103 = por %p101, %p102
      %s105 = sadd.s32 %s104, 1
      %p108 = scmp.eq.s32.totalorder %s14, 3
      %p109 = scmp.ne.s32.totalorder %s104, %s106
      %p110 = scmp.eq.s32.totalorder %s14, 0
      %p111 = por %p109, %p110
      %p112 = scmp.ne.s32.totalorder %s104, %s106
      %p113 = scmp.eq.s32.totalorder %s19, 3
      %p114 = por %p112, %p113
      %p115 = scmp.ne.s32.totalorder %s106, %s107
      %p116 = scmp.eq.s32.totalorder %s19, 0
      %p117 = por %p115, %p116
      %p118 = scmp.ne.s32.totalorder %s106, %s107
      %p119 = scmp.eq.s32.totalorder %s20, 3
      %p120 = por %p118, %p119
      %p122 = scmp.ne.s32.totalorder %s107, %s121
      %p123 = scmp.eq.s32.totalorder %s20, 0
      %p124 = por %p122, %p123
      %s126 = sadd.s32 %s125, 1
      %p129 = scmp.eq.s32.totalorder %s14, 3
      %p130 = scmp.ne.s32.totalorder %s125, %s127
      %p131 = scmp.eq.s32.totalorder %s14, 0
      %p132 = por %p130, %p131
      %p133 = scmp.ne.s32.totalorder %s125, %s127
      %p134 = scmp.eq.s32.totalorder %s19, 3
      %p135 = por %p133, %p134
      %p136 = scmp.ne.s32.totalorder %s127, %s128
      %p137 = scmp.eq.s32.totalorder %s19, 0
      %p138 = por %p136, %p137
      %p139 = scmp.ne.s32.totalorder %s127, %s128
      %p140 = scmp.eq.s32.totalorder %s20, 3
      %p141 = por %p139, %p140
      %p143 = scmp.ne.s32.totalorder %s128, %s142
      %p144 = scmp.eq.s32.totalorder %s20, 0
      %p145 = por %p143, %p144
      %s147 = sadd.s32 %s146, 1
      %p150 = scmp.eq.s32.totalorder %s14, 3
      %p151 = scmp.ne.s32.totalorder %s146, %s148
      %p152 = scmp.eq.s32.totalorder %s14, 0
      %p153 = por %p151, %p152
      %p154 = scmp.ne.s32.totalorder %s146, %s148
      %p155 = scmp.eq.s32.totalorder %s19, 3
      %p156 = por %p154, %p155
      %p157 = scmp.ne.s32.totalorder %s148, %s149
      %p158 = scmp.eq.s32.totalorder %s19, 0
      %p159 = por %p157, %p158
      %p160 = scmp.ne.s32.totalorder %s148, %s149
      %p161 = scmp.eq.s32.totalorder %s20, 3
      %p162 = por %p160, %p161
      %p164 = scmp.ne.s32.totalorder %s149, %s163
      %p165 = scmp.eq.s32.totalorder %s20, 0
      %p166 = por %p164, %p165
      %s167 = ssub.s32 %s22, %s29
      %s168 = ssub.s32 %s21, %s33
      %s169 = sor.u32 %s167, %s168
      %p170 = scmp.eq.s32.totalorder %s169, 0
      %s172 = sadd.s32 %s171, 1
      %s173 = scalar_select %p170, %s171, %s172
      %p176 = pneg %p170
      %p177 = scmp.eq.s32.totalorder %s14, 3
      %p178 = por %p176, %p177
      %p179 = scmp.ne.s32.totalorder %s171, %s174
      %p180 = scmp.eq.s32.totalorder %s14, 0
      %p181 = por %p179, %p180
      %p182 = scmp.ne.s32.totalorder %s171, %s174
      %p183 = scmp.eq.s32.totalorder %s19, 3
      %p184 = por %p182, %p183
      %p185 = scmp.ne.s32.totalorder %s174, %s175
      %p186 = scmp.eq.s32.totalorder %s19, 0
      %p187 = por %p185, %p186
      %p188 = scmp.ne.s32.totalorder %s174, %s175
      %p189 = scmp.eq.s32.totalorder %s20, 3
      %p190 = por %p188, %p189
      %p192 = scmp.ne.s32.totalorder %s175, %s191
      %p193 = scmp.eq.s32.totalorder %s20, 0
      %p194 = por %p192, %p193
      %s195 = ssub.s32 %s22, %s29
      %s196 = ssub.s32 %s21, %s33
      %s197 = sor.u32 %s195, %s196
      %p198 = scmp.eq.s32.totalorder %s197, 0
      %s200 = sadd.s32 %s199, 1
      %s201 = scalar_select %p198, %s199, %s200
      %p204 = pneg %p198
      %p205 = scmp.eq.s32.totalorder %s14, 3
      %p206 = por %p204, %p205
      %p207 = scmp.ne.s32.totalorder %s199, %s202
      %p208 = scmp.eq.s32.totalorder %s14, 0
      %p209 = por %p207, %p208
      %p210 = scmp.ne.s32.totalorder %s199, %s202
      %p211 = scmp.eq.s32.totalorder %s19, 3
      %p212 = por %p210, %p211
      %p213 = scmp.ne.s32.totalorder %s202, %s203
      %p214 = scmp.eq.s32.totalorder %s19, 0
      %p215 = por %p213, %p214
      %p216 = scmp.ne.s32.totalorder %s202, %s203
      %p217 = scmp.eq.s32.totalorder %s20, 3
      %p218 = por %p216, %p217
      %p220 = scmp.ne.s32.totalorder %s203, %s219
      %p221 = scmp.eq.s32.totalorder %s20, 0
      %p222 = por %p220, %p221
      %p223 = scmp.le.s32.totalorder 1, %s14
      %p224 = scmp.lt.s32.totalorder %s14, 5
      %p225 = pnand %p223, %p224
      %p226 = pneg %p225
      // Predicated region
      $region9: #{rnnbase_forward.1} parent=5 // pred_check
        _
      $region10: #{rnnbase_forward.1} parent=5 // pred_check_branch
        %228 = sbr.rel (%p225) target = $region12
      $region11: #{rnnbase_forward.1} parent=5 // pred_region
        %s229 = ssub.s32 %s14, 1
        // Predicated region
        $region13: #{rnnbase_forward.1} parent=11 // pred_check
          %p230 = pneg %p75
        $region14: #{rnnbase_forward.1} parent=11 // pred_check_branch
          %232 = sbr.rel (%p230) target = $region16
        $region15: #{rnnbase_forward.1} parent=11 // pred_region
          _
        $region16: #{rnnbase_forward.1} parent=11 // pred_fallthru
          _
        // Predicated region
        $region17: #{rnnbase_forward.1} parent=11 // pred_check
          %p233 = pneg %p96
        $region18: #{rnnbase_forward.1} parent=11 // pred_check_branch
          %235 = sbr.rel (%p233) target = $region20
        $region19: #{rnnbase_forward.1} parent=11 // pred_region
          _
        $region20: #{rnnbase_forward.1} parent=11 // pred_fallthru
          _
        // Predicated region
        $region21: #{rnnbase_forward.1} parent=11 // pred_check
          %p236 = pneg %p117
        $region22: #{rnnbase_forward.1} parent=11 // pred_check_branch
          %238 = sbr.rel (%p236) target = $region24
        $region23: #{rnnbase_forward.1} parent=11 // pred_region
          _
        $region24: #{rnnbase_forward.1} parent=11 // pred_fallthru
          _
        // Predicated region
        $region25: #{rnnbase_forward.1} parent=11 // pred_check
          %p239 = pneg %p138
        $region26: #{rnnbase_forward.1} parent=11 // pred_check_branch
          %241 = sbr.rel (%p239) target = $region28
        $region27: #{rnnbase_forward.1} parent=11 // pred_region
          _
        $region28: #{rnnbase_forward.1} parent=11 // pred_fallthru
          _
        // Predicated region
        $region29: #{rnnbase_forward.1} parent=11 // pred_check
          %p242 = pneg %p159
        $region30: #{rnnbase_forward.1} parent=11 // pred_check_branch
          %244 = sbr.rel (%p242) target = $region32
        $region31: #{rnnbase_forward.1} parent=11 // pred_region
          _
        $region32: #{rnnbase_forward.1} parent=11 // pred_fallthru
          _
      $region12: #{rnnbase_forward.1} parent=5 // pred_fallthru
        _
      %p245 = scmp.lt.s32.totalorder %s14, 4
      // Predicated region
      $region33: #{rnnbase_forward.1} parent=5 // pred_check
        %p246 = pneg %p245
      $region34: #{rnnbase_forward.1} parent=5 // pred_check_branch
        %248 = sbr.rel (%p246) target = $region36
      $region35: #{rnnbase_forward.1} parent=5 // pred_region
        // Predicated region
        $region37: #{rnnbase_forward.1} parent=35 // pred_check
          %p249 = pneg %p48
        $region38: #{rnnbase_forward.1} parent=35 // pred_check_branch
          %251 = sbr.rel (%p249) target = $region40
        $region39: #{rnnbase_forward.1} parent=35 // pred_region
          %s252 = sand.u32 %s38, 1
          %s253 = sand.u32 %s38, 1
          %s254 = smul.addr %s253, 64
          %s255 = scalar_lea.vmem [#allocation5], %s254
          %s256 = smul.u32 8, %s22
          %s257 = smul.addr %s256, 2
          %s258 = sadd.s32 %s21, %s257
          %s259 = smul.addr %s258, 8
          %s260 = scalar_lea.vmem %s0, %s259
          // Predicated region
          $region41: #{rnnbase_forward.1} parent=39 // pred_check
            _
          $region42: #{rnnbase_forward.1} parent=39 // pred_check_branch
            %262 = sbr.rel (0) target = $region44
          $region43: #{rnnbase_forward.1} parent=39 // pred_region
            // Predicated region
            $region45: #{rnnbase_forward.1} parent=43 // pred_check
              _
            $region46: #{rnnbase_forward.1} parent=43 // pred_check_branch
              %264 = sbr.rel (0) target = $region48
            $region47: #{rnnbase_forward.1} parent=43 // pred_region
              // Predicated region
              $region60: #{rnnbase_forward.1} parent=47 // pred_check
                _
              $region61: #{rnnbase_forward.1} parent=47 // pred_check_branch
                %293 = sbr.rel (0) target = $region63
              $region62: #{rnnbase_forward.1} parent=47 // pred_region
                loop: start=0, step=1, limit=1
                $region64: #{rnnbase_forward.1} parent=62 // loop_pre_header
                  _
                $region65: #{rnnbase_forward.1} parent=62 // loop_header
                  %s295 = sphi 0, %s299
                  %p296 = scmp.ge.s32.totalorder %s295, 1
                  %s300 = sphi %s260, %s260
                  %s301 = sphi %s255, %s255
                $region66: #{rnnbase_forward.1} parent=62 // loop_header_branch
                  %298 = sbr.rel (%p296) target = $region70
                $region67: #{rnnbase_forward.1} parent=62 // loop_body
                  %v302 = vld [vmem:[%s300] sm:$0xff]
                  %303 = vst [vmem:[%s301] sm:$0xff] %v302
                  %v304 = vld [vmem:[%s300 + $0x10] sm:$0xff]
                  %305 = vst [vmem:[%s301 + $0x8] sm:$0xff] %v304
                  %v306 = vld [vmem:[%s300 + $0x20] sm:$0xff]
                  %307 = vst [vmem:[%s301 + $0x10] sm:$0xff] %v306
                  %v308 = vld [vmem:[%s300 + $0x30] sm:$0xff]
                  %309 = vst [vmem:[%s301 + $0x18] sm:$0xff] %v308
                  %v310 = vld [vmem:[%s300 + $0x40] sm:$0xff]
                  %311 = vst [vmem:[%s301 + $0x20] sm:$0xff] %v310
                  %v312 = vld [vmem:[%s300 + $0x50] sm:$0xff]
                  %313 = vst [vmem:[%s301 + $0x28] sm:$0xff] %v312
                  %v314 = vld [vmem:[%s300 + $0x60] sm:$0xff]
                  %315 = vst [vmem:[%s301 + $0x30] sm:$0xff] %v314
                  %v316 = vld [vmem:[%s300 + $0x70] sm:$0xff]
                  %317 = vst [vmem:[%s301 + $0x38] sm:$0xff] %v316
                $region68: #{rnnbase_forward.1} parent=62 // loop_footer
                  %s299 = sadd.s32 1, %s295
                $region69: #{rnnbase_forward.1} parent=62 // loop_footer_branch
                  %294 = sbr.rel target = $region65
                $region70: #{rnnbase_forward.1} parent=62 // loop_exit
                  _
              $region63: #{rnnbase_forward.1} parent=47 // pred_fallthru
                _
              // Predicated region
              $region71: #{rnnbase_forward.1} parent=47 // pred_check
                _
              $region72: #{rnnbase_forward.1} parent=47 // pred_check_branch
                %319 = sbr.rel target = $region74
              $region73: #{rnnbase_forward.1} parent=47 // pred_region
                _
              $region74: #{rnnbase_forward.1} parent=47 // pred_fallthru
                _
            $region48: #{rnnbase_forward.1} parent=43 // pred_fallthru
              _
            // Predicated region
            $region49: #{rnnbase_forward.1} parent=43 // pred_check
              _
            $region50: #{rnnbase_forward.1} parent=43 // pred_check_branch
              %266 = sbr.rel target = $region52
            $region51: #{rnnbase_forward.1} parent=43 // pred_region
              loop: start=0, step=1, limit=1
              $region53: #{rnnbase_forward.1} parent=51 // loop_pre_header
                _
              $region54: #{rnnbase_forward.1} parent=51 // loop_header
                %s269 = sphi 0, %s273
                %p270 = scmp.ge.s32.totalorder %s269, 1
                %s274 = sphi %s260, %s260
                %s275 = sphi %s255, %s255
              $region55: #{rnnbase_forward.1} parent=51 // loop_header_branch
                %272 = sbr.rel (%p270) target = $region59
              $region56: #{rnnbase_forward.1} parent=51 // loop_body
                %v276 = vld [vmem:[%s274] sm:$0xff]
                %277 = vst [vmem:[%s275] sm:$0xff] %v276
                %v278 = vld [vmem:[%s274 + $0x10] sm:$0xff]
                %279 = vst [vmem:[%s275 + $0x8] sm:$0xff] %v278
                %v280 = vld [vmem:[%s274 + $0x20] sm:$0xff]
                %281 = vst [vmem:[%s275 + $0x10] sm:$0xff] %v280
                %v282 = vld [vmem:[%s274 + $0x30] sm:$0xff]
                %283 = vst [vmem:[%s275 + $0x18] sm:$0xff] %v282
                %v284 = vld [vmem:[%s274 + $0x40] sm:$0xff]
                %285 = vst [vmem:[%s275 + $0x20] sm:$0xff] %v284
                %v286 = vld [vmem:[%s274 + $0x50] sm:$0xff]
                %287 = vst [vmem:[%s275 + $0x28] sm:$0xff] %v286
                %v288 = vld [vmem:[%s274 + $0x60] sm:$0xff]
                %289 = vst [vmem:[%s275 + $0x30] sm:$0xff] %v288
                %v290 = vld [vmem:[%s274 + $0x70] sm:$0xff]
                %291 = vst [vmem:[%s275 + $0x38] sm:$0xff] %v290
              $region57: #{rnnbase_forward.1} parent=51 // loop_footer
                %s273 = sadd.s32 1, %s269
              $region58: #{rnnbase_forward.1} parent=51 // loop_footer_branch
                %268 = sbr.rel target = $region54
              $region59: #{rnnbase_forward.1} parent=51 // loop_exit
                _
            $region52: #{rnnbase_forward.1} parent=43 // pred_fallthru
              _
          $region44: #{rnnbase_forward.1} parent=39 // pred_fallthru
            _
          %320 = vnop
        $region40: #{rnnbase_forward.1} parent=35 // pred_fallthru
          _
      $region36: #{rnnbase_forward.1} parent=5 // pred_fallthru
        _
      %p321 = scmp.le.s32.totalorder 1, %s14
      %p322 = scmp.lt.s32.totalorder %s14, 5
      %p323 = pnand %p321, %p322
      %p324 = pneg %p323
      // Predicated region
      $region75: #{rnnbase_forward.1} parent=5 // pred_check
        _
      $region76: #{rnnbase_forward.1} parent=5 // pred_check_branch
        %326 = sbr.rel (%p323) target = $region78
      $region77: #{rnnbase_forward.1} parent=5 // pred_region
        %s327 = ssub.s32 %s14, 1
        %s328 = sand.u32 %s41, 1
        %s329 = sand.u32 %s41, 1
        %s330 = smul.addr %s329, 64
        %s331 = scalar_lea.vmem [#allocation5], %s330
        // Predicated region
        $region79: #{rnnbase_forward.1} parent=77 // pred_check
          %p332 = pneg %p54
        $region80: #{rnnbase_forward.1} parent=77 // pred_check_branch
          %334 = sbr.rel (%p332) target = $region82
        $region81: #{rnnbase_forward.1} parent=77 // pred_region
          _
        $region82: #{rnnbase_forward.1} parent=77 // pred_fallthru
          _
        %s335 = sand.u32 %s41, 1
        %s336 = sand.u32 %s41, 1
        %s337 = smul.addr %s336, 64
        %s338 = scalar_lea.vmem [#allocation5], %s337
        %p339 = pneg %p54
        %p340 = pneg %p51
        %p341 = pneg %p75
        %p342 = pneg %p72
        %p343 = pneg %p96
        %p344 = pneg %p93
        %p345 = pneg %p117
        %p346 = pneg %p114
        %p347 = pneg %p138
        %p348 = pneg %p135
        %p349 = pneg %p159
        %p350 = pneg %p156
        %p351 = pneg %p187
        %p352 = pneg %p184
        %s353 = sand.u32 %s174, 1
        %s354 = sand.u32 %s174, 1
        %s355 = smul.addr %s354, 64
        %s356 = scalar_lea.vmem [#allocation6], %s355
        %p357 = pneg %p215
        %p358 = pneg %p212
        %s359 = sand.u32 %s202, 1
        %s360 = sand.u32 %s202, 1
        %s361 = smul.addr %s360, 64
        %s362 = scalar_lea.vmem [#allocation7], %s361
        %s363 = smul.u32 8, %s24
        %s364 = smul.u32 8, %s24
        %s365 = smul.u32 8, %s24
        %p366 = scmp.eq.s32.totalorder %s24, 0
        // Predicated region
        $region83: #{rnnbase_forward.1} parent=77 // pred_check
          %p367 = pneg %p366
        $region84: #{rnnbase_forward.1} parent=77 // pred_check_branch
          %369 = sbr.rel (%p367) target = $region86
        $region85: #{rnnbase_forward.1} parent=77 // pred_region
          %vm370 = vcmask 261120
          %371 = vst.msk [vmem:[#allocation2] sm:$0xff] %vm370, 0.0
          %372 = vst.msk [vmem:[#allocation3] sm:$0xff] %vm370, 0.0
        $region86: #{rnnbase_forward.1} parent=77 // pred_fallthru
          _
        %v373 = vld [vmem:[%s331] sm:$0xff]
        %v374 = vld [vmem:[%s331 + $0x8] sm:$0xff]
        %v375 = vld [vmem:[%s331 + $0x10] sm:$0xff]
        %v376 = vld [vmem:[%s331 + $0x18] sm:$0xff]
        %v377 = vld [vmem:[%s331 + $0x20] sm:$0xff]
        %v378 = vld [vmem:[%s331 + $0x28] sm:$0xff]
        %v379 = vld [vmem:[%s331 + $0x30] sm:$0xff]
        %v380 = vld [vmem:[%s331 + $0x38] sm:$0xff]
        %v381 = vld [vmem:[%s1] sm:$0xff]
        %v382 = vld [vmem:[%s3] sm:$0x1]
        %v384 = vlaneseq
        %v385 = vshrl.u32 %v384, 7
        %v386 = vsub.s32 0, %v385
        %v387 = vrot.slane %v382, %v386
        %vm389 = vcmask 64512
        %v391 = vsel %vm389, %v373, 0
        %v394 = vsel %vm389, %v374, 0
        %v397 = vsel %vm389, %v375, 0
        %v400 = vsel %vm389, %v376, 0
        %v403 = vsel %vm389, %v377, 0
        %v406 = vsel %vm389, %v378, 0
        %v409 = vsel %vm389, %v379, 0
        %v412 = vsel %vm389, %v380, 0
        %414 = vmatprep.subr.mxu0 0.0
        %415 = vmatpush1.msra.mxu0 %v381
        %416 = vmatprep.subr.mxu0 0.0
        %417 = vmatpush1.msra.mxu0 0.0
        %418 = vmatprep.subr.mxu0 0.0
        %419 = vmatpush1.msra.mxu0 0.0
        %420 = vmatprep.subr.mxu0 0.0
        %421 = vmatpush1.msra.mxu0 0.0
        %422 = vmatprep.subr.mxu0 0.0
        %423 = vmatpush1.msra.mxu0 0.0
        %424 = vmatprep.subr.mxu0 0.0
        %425 = vmatpush1.msra.mxu0 0.0
        %426 = vmatprep.subr.mxu0 0.0
        %427 = vmatpush1.msra.mxu0 0.0
        %428 = vmatprep.subr.mxu0 0.0
        %429 = vmatpush1.msra.mxu0 0.0
        %430 = vmatprep.subr.mxu0 0.0
        %431 = vmatpush1.msra.mxu0 0.0
        %432 = vmatprep.subr.mxu0 0.0
        %433 = vmatpush1.msra.mxu0 0.0
        %434 = vmatprep.subr.mxu0 0.0
        %435 = vmatpush1.msra.mxu0 0.0
        %436 = vmatprep.subr.mxu0 0.0
        %437 = vmatpush1.msra.mxu0 0.0
        %438 = vmatprep.subr.mxu0 0.0
        %439 = vmatpush1.msra.mxu0 0.0
        %440 = vmatprep.subr.mxu0 0.0
        %441 = vmatpush1.msra.mxu0 0.0
        %442 = vmatprep.subr.mxu0 0.0
        %443 = vmatpush1.msra.mxu0 0.0
        %444 = vmatprep.subr.mxu0 0.0
        %445 = vmatpush1.msra.mxu0 0.0
        %446 = vmatprep.subr.mxu0 0.0
        %447 = vmatpush1.msra.mxu0 0.0
        %448 = vmatprep.subr.mxu0 0.0
        %449 = vmatpush1.msra.mxu0 0.0
        %450 = vmatprep.subr.mxu0 0.0
        %451 = vmatpush1.msra.mxu0 0.0
        %452 = vmatprep.subr.mxu0 0.0
        %453 = vmatpush1.msra.mxu0 0.0
        %454 = vmatprep.subr.mxu0 0.0
        %455 = vmatpush1.msra.mxu0 0.0
        %456 = vmatprep.subr.mxu0 0.0
        %457 = vmatpush1.msra.mxu0 0.0
        %458 = vmatprep.subr.mxu0 0.0
        %459 = vmatpush1.msra.mxu0 0.0
        %460 = vmatprep.subr.mxu0 0.0
        %461 = vmatpush1.msra.mxu0 0.0
        %462 = vmatprep.subr.mxu0 0.0
        %463 = vmatpush1.msra.mxu0 0.0
        %464 = vmatprep.subr.mxu0 0.0
        %465 = vmatpush1.msra.mxu0 0.0
        %466 = vmatprep.subr.mxu0 0.0
        %467 = vmatpush1.msra.mxu0 0.0
        %468 = vmatprep.subr.mxu0 0.0
        %469 = vmatpush1.msra.mxu0 0.0
        %470 = vmatprep.subr.mxu0 0.0
        %471 = vmatpush1.msra.mxu0 0.0
        %472 = vmatprep.subr.mxu0 0.0
        %473 = vmatpush1.msra.mxu0 0.0
        %474 = vmatprep.subr.mxu0 0.0
        %475 = vmatpush1.msra.mxu0 0.0
        %476 = vmatprep.subr.mxu0 0.0
        %477 = vmatpush1.msra.mxu0 0.0
        %478 = vmatprep.mubr.f32.mxu0 0.0
        %479 = vmatmul.mubr.f32.gmra.mrb[0].mxu0 %v391
        %v480 = vpop.f32.mrb[0].mxu0
        %v481 = vadd.f32 %v387, %v480
        %v482 = vpop.f32.mrb[0].mxu0
        %483 = vmatprep.mubr.f32.mxu0 0.0
        %484 = vmatmul.mubr.f32.gmra.mrb[0].mxu0 %v394
        %v485 = vpop.f32.mrb[0].mxu0
        %v486 = vadd.f32 %v387, %v485
        %v487 = vpop.f32.mrb[0].mxu0
        %488 = vmatprep.mubr.f32.mxu0 0.0
        %489 = vmatmul.mubr.f32.gmra.mrb[0].mxu0 %v397
        %v490 = vpop.f32.mrb[0].mxu0
        %v491 = vadd.f32 %v387, %v490
        %v492 = vpop.f32.mrb[0].mxu0
        %493 = vmatprep.mubr.f32.mxu0 0.0
        %494 = vmatmul.mubr.f32.gmra.mrb[0].mxu0 %v400
        %v495 = vpop.f32.mrb[0].mxu0
        %v496 = vadd.f32 %v387, %v495
        %v497 = vpop.f32.mrb[0].mxu0
        %498 = vmatprep.mubr.f32.mxu0 0.0
        %499 = vmatmul.mubr.f32.gmra.mrb[0].mxu0 %v403
        %v500 = vpop.f32.mrb[0].mxu0
        %v501 = vadd.f32 %v387, %v500
        %v502 = vpop.f32.mrb[0].mxu0
        %503 = vmatprep.mubr.f32.mxu0 0.0
        %504 = vmatmul.mubr.f32.gmra.mrb[0].mxu0 %v406
        %v505 = vpop.f32.mrb[0].mxu0
        %v506 = vadd.f32 %v387, %v505
        %v507 = vpop.f32.mrb[0].mxu0
        %508 = vmatprep.mubr.f32.mxu0 0.0
        %509 = vmatmul.mubr.f32.gmra.mrb[0].mxu0 %v409
        %v510 = vpop.f32.mrb[0].mxu0
        %v511 = vadd.f32 %v387, %v510
        %v512 = vpop.f32.mrb[0].mxu0
        %513 = vmatprep.mubr.f32.mxu0 0.0
        %514 = vmatmul.mubr.f32.gmra.mrb[0].mxu0 %v412
        %v515 = vpop.f32.mrb[0].mxu0
        %v516 = vadd.f32 %v387, %v515
        %v517 = vpop.f32.mrb[0].mxu0
        %518 = vdwg.mxu0
        %519 = vst [vmem:[#allocation4] sm:$0xff] %v481
        %520 = vst [vmem:[#allocation4 + $0x8] sm:$0xff] %v486
        %521 = vst [vmem:[#allocation4 + $0x10] sm:$0xff] %v491
        %522 = vst [vmem:[#allocation4 + $0x18] sm:$0xff] %v496
        %523 = vst [vmem:[#allocation4 + $0x20] sm:$0xff] %v501
        %524 = vst [vmem:[#allocation4 + $0x28] sm:$0xff] %v506
        %525 = vst [vmem:[#allocation4 + $0x30] sm:$0xff] %v511
        %526 = vst [vmem:[#allocation4 + $0x38] sm:$0xff] %v516
        loop: start=0, step=1, limit=4
        $region87: #{rnnbase_forward.1} parent=77 // loop_pre_header
          _
        $region88: #{rnnbase_forward.1} parent=77 // loop_header
          %s528 = sphi 0, %s532
          %p529 = scmp.ge.s32.totalorder %s528, 4
        $region89: #{rnnbase_forward.1} parent=77 // loop_header_branch
          %531 = sbr.rel (%p529) target = $region93
        $region90: #{rnnbase_forward.1} parent=77 // loop_body
          %s533 = smul.u32 %s528, 2
          %v534 = vld [vmem:[#allocation2] sm:$0xff]
          %v535 = vld [vmem:[#allocation3] sm:$0xff]
          %s536 = smul.u32 %s533, 8
          %s537 = scalar_lea.vmem [#allocation4], %s536
          %v538 = vld [vmem:[%s537] sm:$0xff]
          %v539 = vld [vmem:[%s2] sm:$0xff]
          %v540 = vld [vmem:[%s2 + $0x8] sm:$0xff]
          %v541 = vld [vmem:[%s2 + $0x10] sm:$0xff]
          %v542 = vld [vmem:[%s2 + $0x18] sm:$0xff]
          %vm543 = vcmask 261120
          %v545 = vsel %vm543, %v534, 0
          %547 = vmatprep.subr.mxu0 0.0
          %548 = vmatpush1.msra.mxu0 %v539
          %549 = vmatprep.subr.mxu0 0.0
          %550 = vmatpush1.msra.mxu0 %v540
          %551 = vmatprep.subr.mxu0 0.0
          %552 = vmatpush1.msra.mxu0 %v541
          %553 = vmatprep.subr.mxu0 0.0
          %554 = vmatpush1.msra.mxu0 %v542
          %555 = vmatprep.subr.mxu0 0.0
          %556 = vmatpush1.msra.mxu0 0.0
          %557 = vmatprep.subr.mxu0 0.0
          %558 = vmatpush1.msra.mxu0 0.0
          %559 = vmatprep.subr.mxu0 0.0
          %560 = vmatpush1.msra.mxu0 0.0
          %561 = vmatprep.subr.mxu0 0.0
          %562 = vmatpush1.msra.mxu0 0.0
          %563 = vmatprep.subr.mxu0 0.0
          %564 = vmatpush1.msra.mxu0 0.0
          %565 = vmatprep.subr.mxu0 0.0
          %566 = vmatpush1.msra.mxu0 0.0
          %567 = vmatprep.subr.mxu0 0.0
          %568 = vmatpush1.msra.mxu0 0.0
          %569 = vmatprep.subr.mxu0 0.0
          %570 = vmatpush1.msra.mxu0 0.0
          %571 = vmatprep.subr.mxu0 0.0
          %572 = vmatpush1.msra.mxu0 0.0
          %573 = vmatprep.subr.mxu0 0.0
          %574 = vmatpush1.msra.mxu0 0.0
          %575 = vmatprep.subr.mxu0 0.0
          %576 = vmatpush1.msra.mxu0 0.0
          %577 = vmatprep.subr.mxu0 0.0
          %578 = vmatpush1.msra.mxu0 0.0
          %579 = vmatprep.subr.mxu0 0.0
          %580 = vmatpush1.msra.mxu0 0.0
          %581 = vmatprep.subr.mxu0 0.0
          %582 = vmatpush1.msra.mxu0 0.0
          %583 = vmatprep.subr.mxu0 0.0
          %584 = vmatpush1.msra.mxu0 0.0
          %585 = vmatprep.subr.mxu0 0.0
          %586 = vmatpush1.msra.mxu0 0.0
          %587 = vmatprep.subr.mxu0 0.0
          %588 = vmatpush1.msra.mxu0 0.0
          %589 = vmatprep.subr.mxu0 0.0
          %590 = vmatpush1.msra.mxu0 0.0
          %591 = vmatprep.subr.mxu0 0.0
          %592 = vmatpush1.msra.mxu0 0.0
          %593 = vmatprep.subr.mxu0 0.0
          %594 = vmatpush1.msra.mxu0 0.0
          %595 = vmatprep.subr.mxu0 0.0
          %596 = vmatpush1.msra.mxu0 0.0
          %597 = vmatprep.subr.mxu0 0.0
          %598 = vmatpush1.msra.mxu0 0.0
          %599 = vmatprep.subr.mxu0 0.0
          %600 = vmatpush1.msra.mxu0 0.0
          %601 = vmatprep.subr.mxu0 0.0
          %602 = vmatpush1.msra.mxu0 0.0
          %603 = vmatprep.subr.mxu0 0.0
          %604 = vmatpush1.msra.mxu0 0.0
          %605 = vmatprep.subr.mxu0 0.0
          %606 = vmatpush1.msra.mxu0 0.0
          %607 = vmatprep.subr.mxu0 0.0
          %608 = vmatpush1.msra.mxu0 0.0
          %609 = vmatprep.subr.mxu0 0.0
          %610 = vmatpush1.msra.mxu0 0.0
          %611 = vmatprep.mubr.f32.mxu0 0.0
          %612 = vmatmul.mubr.f32.gmra.mrb[0].mxu0 %v545
          %v613 = vpop.f32.mrb[0].mxu0
          %v614 = vadd.f32 0.0, %v613
          %v615 = vpop.f32.mrb[0].mxu0
          %616 = vdwg.mxu0
          %v617 = vadd.f32 %v538, %v614
          %v618 = vxor.u32 %v617, 2147483648
          %v619 = vmul.f32 %v618, 1.442695
          %v620 = vpow.pop %v619
          %v621 = vadd.f32 %v620, 1.0
          %v622 = vrcp.pop %v621
          %v623 = vmul.f32 1.0, %v622
          %625 = vrot.lane.b32.xlu0 %v623, 96
          %v626 = vpop.permute.xlu0 %625
          %v628 = vmul.f32 %v535, %v626
          %629 = vrot.lane.b32.xlu0 %v623, 64
          %v630 = vpop.permute.xlu0 %629
          %v632 = vmul.f32 %v623, %v630
          %v633 = vadd.f32 %v628, %v632
          %v634 = vtanh.pop %v633
          %636 = vrot.lane.b32.xlu0 %v634, 96
          %v637 = vpop.permute.xlu0 %636
          %v639 = vmul.f32 %v623, %v637
          %640 = vst.msk [vmem:[#allocation2] sm:$0xff] %vm543, %v633
          %642 = vrot.lane.b32.xlu0 %v639, 32
          %v643 = vpop.permute.xlu0 %642
          %645 = vst.msk [vmem:[#allocation3] sm:$0xff] %vm543, %v643
          %s646 = scalar_lea.vmem %s362, %s536 [#allocation7]
          %647 = vst.msk [vmem:[%s646] sm:$0xff] %vm543, %v633
          %s648 = sadd.s32 %s533, 1
          %v649 = vld [vmem:[#allocation2] sm:$0xff]
          %v650 = vld [vmem:[#allocation3] sm:$0xff]
          %s651 = smul.u32 %s648, 8
          %s652 = scalar_lea.vmem [#allocation4], %s651
          %v653 = vld [vmem:[%s652] sm:$0xff]
          %v654 = vld [vmem:[%s2] sm:$0xff]
          %v655 = vld [vmem:[%s2 + $0x8] sm:$0xff]
          %v656 = vld [vmem:[%s2 + $0x10] sm:$0xff]
          %v657 = vld [vmem:[%s2 + $0x18] sm:$0xff]
          %v659 = vsel %vm543, %v649, 0
          %661 = vmatprep.subr.mxu0 0.0
          %662 = vmatpush1.msra.mxu0 %v654
          %663 = vmatprep.subr.mxu0 0.0
          %664 = vmatpush1.msra.mxu0 %v655
          %665 = vmatprep.subr.mxu0 0.0
          %666 = vmatpush1.msra.mxu0 %v656
          %667 = vmatprep.subr.mxu0 0.0
          %668 = vmatpush1.msra.mxu0 %v657
          %669 = vmatprep.subr.mxu0 0.0
          %670 = vmatpush1.msra.mxu0 0.0
          %671 = vmatprep.subr.mxu0 0.0
          %672 = vmatpush1.msra.mxu0 0.0
          %673 = vmatprep.subr.mxu0 0.0
          %674 = vmatpush1.msra.mxu0 0.0
          %675 = vmatprep.subr.mxu0 0.0
          %676 = vmatpush1.msra.mxu0 0.0
          %677 = vmatprep.subr.mxu0 0.0
          %678 = vmatpush1.msra.mxu0 0.0
          %679 = vmatprep.subr.mxu0 0.0
          %680 = vmatpush1.msra.mxu0 0.0
          %681 = vmatprep.subr.mxu0 0.0
          %682 = vmatpush1.msra.mxu0 0.0
          %683 = vmatprep.subr.mxu0 0.0
          %684 = vmatpush1.msra.mxu0 0.0
          %685 = vmatprep.subr.mxu0 0.0
          %686 = vmatpush1.msra.mxu0 0.0
          %687 = vmatprep.subr.mxu0 0.0
          %688 = vmatpush1.msra.mxu0 0.0
          %689 = vmatprep.subr.mxu0 0.0
          %690 = vmatpush1.msra.mxu0 0.0
          %691 = vmatprep.subr.mxu0 0.0
          %692 = vmatpush1.msra.mxu0 0.0
          %693 = vmatprep.subr.mxu0 0.0
          %694 = vmatpush1.msra.mxu0 0.0
          %695 = vmatprep.subr.mxu0 0.0
          %696 = vmatpush1.msra.mxu0 0.0
          %697 = vmatprep.subr.mxu0 0.0
          %698 = vmatpush1.msra.mxu0 0.0
          %699 = vmatprep.subr.mxu0 0.0
          %700 = vmatpush1.msra.mxu0 0.0
          %701 = vmatprep.subr.mxu0 0.0
          %702 = vmatpush1.msra.mxu0 0.0
          %703 = vmatprep.subr.mxu0 0.0
          %704 = vmatpush1.msra.mxu0 0.0
          %705 = vmatprep.subr.mxu0 0.0
          %706 = vmatpush1.msra.mxu0 0.0
          %707 = vmatprep.subr.mxu0 0.0
          %708 = vmatpush1.msra.mxu0 0.0
          %709 = vmatprep.subr.mxu0 0.0
          %710 = vmatpush1.msra.mxu0 0.0
          %711 = vmatprep.subr.mxu0 0.0
          %712 = vmatpush1.msra.mxu0 0.0
          %713 = vmatprep.subr.mxu0 0.0
          %714 = vmatpush1.msra.mxu0 0.0
          %715 = vmatprep.subr.mxu0 0.0
          %716 = vmatpush1.msra.mxu0 0.0
          %717 = vmatprep.subr.mxu0 0.0
          %718 = vmatpush1.msra.mxu0 0.0
          %719 = vmatprep.subr.mxu0 0.0
          %720 = vmatpush1.msra.mxu0 0.0
          %721 = vmatprep.subr.mxu0 0.0
          %722 = vmatpush1.msra.mxu0 0.0
          %723 = vmatprep.subr.mxu0 0.0
          %724 = vmatpush1.msra.mxu0 0.0
          %725 = vmatprep.mubr.f32.mxu0 0.0
          %726 = vmatmul.mubr.f32.gmra.mrb[0].mxu0 %v659
          %v727 = vpop.f32.mrb[0].mxu0
          %v728 = vadd.f32 0.0, %v727
          %v729 = vpop.f32.mrb[0].mxu0
          %730 = vdwg.mxu0
          %v731 = vadd.f32 %v653, %v728
          %v732 = vxor.u32 %v731, 2147483648
          %v733 = vmul.f32 %v732, 1.442695
          %v734 = vpow.pop %v733
          %v735 = vadd.f32 %v734, 1.0
          %v736 = vrcp.pop %v735
          %v737 = vmul.f32 1.0, %v736
          %739 = vrot.lane.b32.xlu0 %v737, 96
          %v740 = vpop.permute.xlu0 %739
          %v742 = vmul.f32 %v650, %v740
          %743 = vrot.lane.b32.xlu0 %v737, 64
          %v744 = vpop.permute.xlu0 %743
          %v746 = vmul.f32 %v737, %v744
          %v747 = vadd.f32 %v742, %v746
          %v748 = vtanh.pop %v747
          %750 = vrot.lane.b32.xlu0 %v748, 96
          %v751 = vpop.permute.xlu0 %750
          %v753 = vmul.f32 %v737, %v751
          %754 = vst.msk [vmem:[#allocation2] sm:$0xff] %vm543, %v747
          %756 = vrot.lane.b32.xlu0 %v753, 32
          %v757 = vpop.permute.xlu0 %756
          %759 = vst.msk [vmem:[#allocation3] sm:$0xff] %vm543, %v757
          %s760 = scalar_lea.vmem %s362, %s651 [#allocation7]
          %761 = vst.msk [vmem:[%s760] sm:$0xff] %vm543, %v747
        $region91: #{rnnbase_forward.1} parent=77 // loop_footer
          %s532 = sadd.s32 1, %s528
        $region92: #{rnnbase_forward.1} parent=77 // loop_footer_branch
          %527 = sbr.rel target = $region88
        $region93: #{rnnbase_forward.1} parent=77 // loop_exit
          _
        %v762 = vld [vmem:[%s362] sm:$0xff]
        %v763 = vld [vmem:[%s362 + $0x8] sm:$0xff]
        %v764 = vld [vmem:[%s362 + $0x10] sm:$0xff]
        %v765 = vld [vmem:[%s362 + $0x18] sm:$0xff]
        %v766 = vld [vmem:[%s362 + $0x20] sm:$0xff]
        %v767 = vld [vmem:[%s362 + $0x28] sm:$0xff]
        %v768 = vld [vmem:[%s362 + $0x30] sm:$0xff]
        %v769 = vld [vmem:[%s362 + $0x38] sm:$0xff]
        %v770 = vld [vmem:[%s4] sm:$0xff]
        %v771 = vld [vmem:[%s4 + $0x8] sm:$0xff]
        %v772 = vld [vmem:[%s4 + $0x10] sm:$0xff]
        %v773 = vld [vmem:[%s4 + $0x18] sm:$0xff]
        %v774 = vld [vmem:[%s5] sm:$0x1]
        %v776 = vlaneseq
        %v777 = vshrl.u32 %v776, 7
        %v778 = vsub.s32 0, %v777
        %v779 = vrot.slane %v774, %v778
        %vm781 = vcmask 261120
        %v783 = vsel %vm781, %v762, 0
        %v786 = vsel %vm781, %v763, 0
        %v789 = vsel %vm781, %v764, 0
        %v792 = vsel %vm781, %v765, 0
        %v795 = vsel %vm781, %v766, 0
        %v798 = vsel %vm781, %v767, 0
        %v801 = vsel %vm781, %v768, 0
        %v804 = vsel %vm781, %v769, 0
        %806 = vmatprep.subr.mxu0 0.0
        %807 = vmatpush1.msra.mxu0 %v770
        %808 = vmatprep.subr.mxu0 0.0
        %809 = vmatpush1.msra.mxu0 %v771
        %810 = vmatprep.subr.mxu0 0.0
        %811 = vmatpush1.msra.mxu0 %v772
        %812 = vmatprep.subr.mxu0 0.0
        %813 = vmatpush1.msra.mxu0 %v773
        %814 = vmatprep.subr.mxu0 0.0
        %815 = vmatpush1.msra.mxu0 0.0
        %816 = vmatprep.subr.mxu0 0.0
        %817 = vmatpush1.msra.mxu0 0.0
        %818 = vmatprep.subr.mxu0 0.0
        %819 = vmatpush1.msra.mxu0 0.0
        %820 = vmatprep.subr.mxu0 0.0
        %821 = vmatpush1.msra.mxu0 0.0
        %822 = vmatprep.subr.mxu0 0.0
        %823 = vmatpush1.msra.mxu0 0.0
        %824 = vmatprep.subr.mxu0 0.0
        %825 = vmatpush1.msra.mxu0 0.0
        %826 = vmatprep.subr.mxu0 0.0
        %827 = vmatpush1.msra.mxu0 0.0
        %828 = vmatprep.subr.mxu0 0.0
        %829 = vmatpush1.msra.mxu0 0.0
        %830 = vmatprep.subr.mxu0 0.0
        %831 = vmatpush1.msra.mxu0 0.0
        %832 = vmatprep.subr.mxu0 0.0
        %833 = vmatpush1.msra.mxu0 0.0
        %834 = vmatprep.subr.mxu0 0.0
        %835 = vmatpush1.msra.mxu0 0.0
        %836 = vmatprep.subr.mxu0 0.0
        %837 = vmatpush1.msra.mxu0 0.0
        %838 = vmatprep.subr.mxu0 0.0
        %839 = vmatpush1.msra.mxu0 0.0
        %840 = vmatprep.subr.mxu0 0.0
        %841 = vmatpush1.msra.mxu0 0.0
        %842 = vmatprep.subr.mxu0 0.0
        %843 = vmatpush1.msra.mxu0 0.0
        %844 = vmatprep.subr.mxu0 0.0
        %845 = vmatpush1.msra.mxu0 0.0
        %846 = vmatprep.subr.mxu0 0.0
        %847 = vmatpush1.msra.mxu0 0.0
        %848 = vmatprep.subr.mxu0 0.0
        %849 = vmatpush1.msra.mxu0 0.0
        %850 = vmatprep.subr.mxu0 0.0
        %851 = vmatpush1.msra.mxu0 0.0
        %852 = vmatprep.subr.mxu0 0.0
        %853 = vmatpush1.msra.mxu0 0.0
        %854 = vmatprep.subr.mxu0 0.0
        %855 = vmatpush1.msra.mxu0 0.0
        %856 = vmatprep.subr.mxu0 0.0
        %857 = vmatpush1.msra.mxu0 0.0
        %858 = vmatprep.subr.mxu0 0.0
        %859 = vmatpush1.msra.mxu0 0.0
        %860 = vmatprep.subr.mxu0 0.0
        %861 = vmatpush1.msra.mxu0 0.0
        %862 = vmatprep.subr.mxu0 0.0
        %863 = vmatpush1.msra.mxu0 0.0
        %864 = vmatprep.subr.mxu0 0.0
        %865 = vmatpush1.msra.mxu0 0.0
        %866 = vmatprep.subr.mxu0 0.0
        %867 = vmatpush1.msra.mxu0 0.0
        %868 = vmatprep.subr.mxu0 0.0
        %869 = vmatpush1.msra.mxu0 0.0
        %870 = vmatprep.mubr.f32.mxu0 0.0
        %871 = vmatmul.mubr.f32.gmra.mrb[0].mxu0 %v783
        %v872 = vpop.f32.mrb[0].mxu0
        %v873 = vadd.f32 %v779, %v872
        %v874 = vpop.f32.mrb[0].mxu0
        %875 = vmatprep.mubr.f32.mxu0 0.0
        %876 = vmatmul.mubr.f32.gmra.mrb[0].mxu0 %v786
        %v877 = vpop.f32.mrb[0].mxu0
        %v878 = vadd.f32 %v779, %v877
        %v879 = vpop.f32.mrb[0].mxu0
        %880 = vmatprep.mubr.f32.mxu0 0.0
        %881 = vmatmul.mubr.f32.gmra.mrb[0].mxu0 %v789
        %v882 = vpop.f32.mrb[0].mxu0
        %v883 = vadd.f32 %v779, %v882
        %v884 = vpop.f32.mrb[0].mxu0
        %885 = vmatprep.mubr.f32.mxu0 0.0
        %886 = vmatmul.mubr.f32.gmra.mrb[0].mxu0 %v792
        %v887 = vpop.f32.mrb[0].mxu0
        %v888 = vadd.f32 %v779, %v887
        %v889 = vpop.f32.mrb[0].mxu0
        %890 = vmatprep.mubr.f32.mxu0 0.0
        %891 = vmatmul.mubr.f32.gmra.mrb[0].mxu0 %v795
        %v892 = vpop.f32.mrb[0].mxu0
        %v893 = vadd.f32 %v779, %v892
        %v894 = vpop.f32.mrb[0].mxu0
        %895 = vmatprep.mubr.f32.mxu0 0.0
        %896 = vmatmul.mubr.f32.gmra.mrb[0].mxu0 %v798
        %v897 = vpop.f32.mrb[0].mxu0
        %v898 = vadd.f32 %v779, %v897
        %v899 = vpop.f32.mrb[0].mxu0
        %900 = vmatprep.mubr.f32.mxu0 0.0
        %901 = vmatmul.mubr.f32.gmra.mrb[0].mxu0 %v801
        %v902 = vpop.f32.mrb[0].mxu0
        %v903 = vadd.f32 %v779, %v902
        %v904 = vpop.f32.mrb[0].mxu0
        %905 = vmatprep.mubr.f32.mxu0 0.0
        %906 = vmatmul.mubr.f32.gmra.mrb[0].mxu0 %v804
        %v907 = vpop.f32.mrb[0].mxu0
        %v908 = vadd.f32 %v779, %v907
        %v909 = vpop.f32.mrb[0].mxu0
        %910 = vdwg.mxu0
        %911 = vst.msk [vmem:[%s356] sm:$0xff] %vm389, %v873
        %912 = vst.msk [vmem:[%s356 + $0x8] sm:$0xff] %vm389, %v878
        %913 = vst.msk [vmem:[%s356 + $0x10] sm:$0xff] %vm389, %v883
        %914 = vst.msk [vmem:[%s356 + $0x18] sm:$0xff] %vm389, %v888
        %915 = vst.msk [vmem:[%s356 + $0x20] sm:$0xff] %vm389, %v893
        %916 = vst.msk [vmem:[%s356 + $0x28] sm:$0xff] %vm389, %v898
        %917 = vst.msk [vmem:[%s356 + $0x30] sm:$0xff] %vm389, %v903
        %918 = vst.msk [vmem:[%s356 + $0x38] sm:$0xff] %vm389, %v908
        %v919 = vtanh.pop %v762
        %v920 = vtanh.pop %v763
        %v921 = vtanh.pop %v764
        %v922 = vtanh.pop %v765
        %v923 = vtanh.pop %v766
        %v924 = vtanh.pop %v767
        %v925 = vtanh.pop %v768
        %v926 = vtanh.pop %v769
        %927 = vst.msk [vmem:[%s362] sm:$0xff] %vm781, %v919
        %928 = vst.msk [vmem:[%s362 + $0x8] sm:$0xff] %vm781, %v920
        %929 = vst.msk [vmem:[%s362 + $0x10] sm:$0xff] %vm781, %v921
        %930 = vst.msk [vmem:[%s362 + $0x18] sm:$0xff] %vm781, %v922
        %931 = vst.msk [vmem:[%s362 + $0x20] sm:$0xff] %vm781, %v923
        %932 = vst.msk [vmem:[%s362 + $0x28] sm:$0xff] %vm781, %v924
        %933 = vst.msk [vmem:[%s362 + $0x30] sm:$0xff] %vm781, %v925
        %934 = vst.msk [vmem:[%s362 + $0x38] sm:$0xff] %vm781, %v926
        %s935 = sand.u32 %s174, 1
        %s936 = sand.u32 %s174, 1
        %s937 = smul.addr %s936, 64
        %s938 = scalar_lea.vmem [#allocation6], %s937
        %s939 = sand.u32 %s202, 1
        %s940 = sand.u32 %s202, 1
        %s941 = smul.addr %s940, 64
        %s942 = scalar_lea.vmem [#allocation7], %s941
        // Predicated region
        $region94: #{rnnbase_forward.1} parent=77 // pred_check
          %p943 = pneg %p184
        $region95: #{rnnbase_forward.1} parent=77 // pred_check_branch
          %945 = sbr.rel (%p943) target = $region97
        $region96: #{rnnbase_forward.1} parent=77 // pred_region
          %s946 = smul.u32 8, %s24
          %s947 = smul.addr %s946, 2
          %s948 = sadd.s32 %s23, %s947
          %s949 = smul.addr %s948, 8
          %s950 = scalar_lea.vmem %s6, %s949
          // Predicated region
          $region98: #{rnnbase_forward.1} parent=96 // pred_check
            _
          $region99: #{rnnbase_forward.1} parent=96 // pred_check_branch
            %952 = sbr.rel (0) target = $region101
          $region100: #{rnnbase_forward.1} parent=96 // pred_region
            // Predicated region
            $region102: #{rnnbase_forward.1} parent=100 // pred_check
              _
            $region103: #{rnnbase_forward.1} parent=100 // pred_check_branch
              %954 = sbr.rel (0) target = $region105
            $region104: #{rnnbase_forward.1} parent=100 // pred_region
              // Predicated region
              $region117: #{rnnbase_forward.1} parent=104 // pred_check
                _
              $region118: #{rnnbase_forward.1} parent=104 // pred_check_branch
                %983 = sbr.rel (0) target = $region120
              $region119: #{rnnbase_forward.1} parent=104 // pred_region
                loop: start=0, step=1, limit=1
                $region121: #{rnnbase_forward.1} parent=119 // loop_pre_header
                  _
                $region122: #{rnnbase_forward.1} parent=119 // loop_header
                  %s985 = sphi 0, %s989
                  %p986 = scmp.ge.s32.totalorder %s985, 1
                  %s990 = sphi %s938, %s938
                  %s991 = sphi %s950, %s950
                $region123: #{rnnbase_forward.1} parent=119 // loop_header_branch
                  %988 = sbr.rel (%p986) target = $region127
                $region124: #{rnnbase_forward.1} parent=119 // loop_body
                  %v992 = vld [vmem:[%s990] sm:$0xff]
                  %993 = vst [vmem:[%s991] sm:$0xff] %v992
                  %v994 = vld [vmem:[%s990 + $0x8] sm:$0xff]
                  %995 = vst [vmem:[%s991 + $0x10] sm:$0xff] %v994
                  %v996 = vld [vmem:[%s990 + $0x10] sm:$0xff]
                  %997 = vst [vmem:[%s991 + $0x20] sm:$0xff] %v996
                  %v998 = vld [vmem:[%s990 + $0x18] sm:$0xff]
                  %999 = vst [vmem:[%s991 + $0x30] sm:$0xff] %v998
                  %v1000 = vld [vmem:[%s990 + $0x20] sm:$0xff]
                  %1001 = vst [vmem:[%s991 + $0x40] sm:$0xff] %v1000
                  %v1002 = vld [vmem:[%s990 + $0x28] sm:$0xff]
                  %1003 = vst [vmem:[%s991 + $0x50] sm:$0xff] %v1002
                  %v1004 = vld [vmem:[%s990 + $0x30] sm:$0xff]
                  %1005 = vst [vmem:[%s991 + $0x60] sm:$0xff] %v1004
                  %v1006 = vld [vmem:[%s990 + $0x38] sm:$0xff]
                  %1007 = vst [vmem:[%s991 + $0x70] sm:$0xff] %v1006
                $region125: #{rnnbase_forward.1} parent=119 // loop_footer
                  %s989 = sadd.s32 1, %s985
                $region126: #{rnnbase_forward.1} parent=119 // loop_footer_branch
                  %984 = sbr.rel target = $region122
                $region127: #{rnnbase_forward.1} parent=119 // loop_exit
                  _
              $region120: #{rnnbase_forward.1} parent=104 // pred_fallthru
                _
              // Predicated region
              $region128: #{rnnbase_forward.1} parent=104 // pred_check
                _
              $region129: #{rnnbase_forward.1} parent=104 // pred_check_branch
                %1009 = sbr.rel target = $region131
              $region130: #{rnnbase_forward.1} parent=104 // pred_region
                _
              $region131: #{rnnbase_forward.1} parent=104 // pred_fallthru
                _
            $region105: #{rnnbase_forward.1} parent=100 // pred_fallthru
              _
            // Predicated region
            $region106: #{rnnbase_forward.1} parent=100 // pred_check
              _
            $region107: #{rnnbase_forward.1} parent=100 // pred_check_branch
              %956 = sbr.rel target = $region109
            $region108: #{rnnbase_forward.1} parent=100 // pred_region
              loop: start=0, step=1, limit=1
              $region110: #{rnnbase_forward.1} parent=108 // loop_pre_header
                _
              $region111: #{rnnbase_forward.1} parent=108 // loop_header
                %s959 = sphi 0, %s963
                %p960 = scmp.ge.s32.totalorder %s959, 1
                %s964 = sphi %s938, %s938
                %s965 = sphi %s950, %s950
              $region112: #{rnnbase_forward.1} parent=108 // loop_header_branch
                %962 = sbr.rel (%p960) target = $region116
              $region113: #{rnnbase_forward.1} parent=108 // loop_body
                %v966 = vld [vmem:[%s964] sm:$0xff]
                %967 = vst [vmem:[%s965] sm:$0xff] %v966
                %v968 = vld [vmem:[%s964 + $0x8] sm:$0xff]
                %969 = vst [vmem:[%s965 + $0x10] sm:$0xff] %v968
                %v970 = vld [vmem:[%s964 + $0x10] sm:$0xff]
                %971 = vst [vmem:[%s965 + $0x20] sm:$0xff] %v970
                %v972 = vld [vmem:[%s964 + $0x18] sm:$0xff]
                %973 = vst [vmem:[%s965 + $0x30] sm:$0xff] %v972
                %v974 = vld [vmem:[%s964 + $0x20] sm:$0xff]
                %975 = vst [vmem:[%s965 + $0x40] sm:$0xff] %v974
                %v976 = vld [vmem:[%s964 + $0x28] sm:$0xff]
                %977 = vst [vmem:[%s965 + $0x50] sm:$0xff] %v976
                %v978 = vld [vmem:[%s964 + $0x30] sm:$0xff]
                %979 = vst [vmem:[%s965 + $0x60] sm:$0xff] %v978
                %v980 = vld [vmem:[%s964 + $0x38] sm:$0xff]
                %981 = vst [vmem:[%s965 + $0x70] sm:$0xff] %v980
              $region114: #{rnnbase_forward.1} parent=108 // loop_footer
                %s963 = sadd.s32 1, %s959
              $region115: #{rnnbase_forward.1} parent=108 // loop_footer_branch
                %958 = sbr.rel target = $region111
              $region116: #{rnnbase_forward.1} parent=108 // loop_exit
                _
            $region109: #{rnnbase_forward.1} parent=100 // pred_fallthru
              _
          $region101: #{rnnbase_forward.1} parent=96 // pred_fallthru
            _
          %1010 = vnop
        $region97: #{rnnbase_forward.1} parent=77 // pred_fallthru
          _
        // Predicated region
        $region132: #{rnnbase_forward.1} parent=77 // pred_check
          %p1011 = pneg %p212
        $region133: #{rnnbase_forward.1} parent=77 // pred_check_branch
          %1013 = sbr.rel (%p1011) target = $region135
        $region134: #{rnnbase_forward.1} parent=77 // pred_region
          %s1014 = smul.u32 8, %s24
          %s1015 = smul.addr %s1014, 2
          %s1016 = sadd.s32 %s23, %s1015
          %s1017 = smul.addr %s1016, 8
          %s1018 = scalar_lea.vmem %s7, %s1017
          // Predicated region
          $region136: #{rnnbase_forward.1} parent=134 // pred_check
            _
          $region137: #{rnnbase_forward.1} parent=134 // pred_check_branch
            %1020 = sbr.rel (0) target = $region139
          $region138: #{rnnbase_forward.1} parent=134 // pred_region
            // Predicated region
            $region140: #{rnnbase_forward.1} parent=138 // pred_check
              _
            $region141: #{rnnbase_forward.1} parent=138 // pred_check_branch
              %1022 = sbr.rel (0) target = $region143
            $region142: #{rnnbase_forward.1} parent=138 // pred_region
              // Predicated region
              $region155: #{rnnbase_forward.1} parent=142 // pred_check
                _
              $region156: #{rnnbase_forward.1} parent=142 // pred_check_branch
                %1051 = sbr.rel (0) target = $region158
              $region157: #{rnnbase_forward.1} parent=142 // pred_region
                loop: start=0, step=1, limit=1
                $region159: #{rnnbase_forward.1} parent=157 // loop_pre_header
                  _
                $region160: #{rnnbase_forward.1} parent=157 // loop_header
                  %s1053 = sphi 0, %s1057
                  %p1054 = scmp.ge.s32.totalorder %s1053, 1
                  %s1058 = sphi %s942, %s942
                  %s1059 = sphi %s1018, %s1018
                $region161: #{rnnbase_forward.1} parent=157 // loop_header_branch
                  %1056 = sbr.rel (%p1054) target = $region165
                $region162: #{rnnbase_forward.1} parent=157 // loop_body
                  %v1060 = vld [vmem:[%s1058] sm:$0xff]
                  %1061 = vst [vmem:[%s1059] sm:$0xff] %v1060
                  %v1062 = vld [vmem:[%s1058 + $0x8] sm:$0xff]
                  %1063 = vst [vmem:[%s1059 + $0x10] sm:$0xff] %v1062
                  %v1064 = vld [vmem:[%s1058 + $0x10] sm:$0xff]
                  %1065 = vst [vmem:[%s1059 + $0x20] sm:$0xff] %v1064
                  %v1066 = vld [vmem:[%s1058 + $0x18] sm:$0xff]
                  %1067 = vst [vmem:[%s1059 + $0x30] sm:$0xff] %v1066
                  %v1068 = vld [vmem:[%s1058 + $0x20] sm:$0xff]
                  %1069 = vst [vmem:[%s1059 + $0x40] sm:$0xff] %v1068
                  %v1070 = vld [vmem:[%s1058 + $0x28] sm:$0xff]
                  %1071 = vst [vmem:[%s1059 + $0x50] sm:$0xff] %v1070
                  %v1072 = vld [vmem:[%s1058 + $0x30] sm:$0xff]
                  %1073 = vst [vmem:[%s1059 + $0x60] sm:$0xff] %v1072
                  %v1074 = vld [vmem:[%s1058 + $0x38] sm:$0xff]
                  %1075 = vst [vmem:[%s1059 + $0x70] sm:$0xff] %v1074
                $region163: #{rnnbase_forward.1} parent=157 // loop_footer
                  %s1057 = sadd.s32 1, %s1053
                $region164: #{rnnbase_forward.1} parent=157 // loop_footer_branch
                  %1052 = sbr.rel target = $region160
                $region165: #{rnnbase_forward.1} parent=157 // loop_exit
                  _
              $region158: #{rnnbase_forward.1} parent=142 // pred_fallthru
                _
              // Predicated region
              $region166: #{rnnbase_forward.1} parent=142 // pred_check
                _
              $region167: #{rnnbase_forward.1} parent=142 // pred_check_branch
                %1077 = sbr.rel target = $region169
              $region168: #{rnnbase_forward.1} parent=142 // pred_region
                _
              $region169: #{rnnbase_forward.1} parent=142 // pred_fallthru
                _
            $region143: #{rnnbase_forward.1} parent=138 // pred_fallthru
              _
            // Predicated region
            $region144: #{rnnbase_forward.1} parent=138 // pred_check
              _
            $region145: #{rnnbase_forward.1} parent=138 // pred_check_branch
              %1024 = sbr.rel target = $region147
            $region146: #{rnnbase_forward.1} parent=138 // pred_region
              loop: start=0, step=1, limit=1
              $region148: #{rnnbase_forward.1} parent=146 // loop_pre_header
                _
              $region149: #{rnnbase_forward.1} parent=146 // loop_header
                %s1027 = sphi 0, %s1031
                %p1028 = scmp.ge.s32.totalorder %s1027, 1
                %s1032 = sphi %s942, %s942
                %s1033 = sphi %s1018, %s1018
              $region150: #{rnnbase_forward.1} parent=146 // loop_header_branch
                %1030 = sbr.rel (%p1028) target = $region154
              $region151: #{rnnbase_forward.1} parent=146 // loop_body
                %v1034 = vld [vmem:[%s1032] sm:$0xff]
                %1035 = vst [vmem:[%s1033] sm:$0xff] %v1034
                %v1036 = vld [vmem:[%s1032 + $0x8] sm:$0xff]
                %1037 = vst [vmem:[%s1033 + $0x10] sm:$0xff] %v1036
                %v1038 = vld [vmem:[%s1032 + $0x10] sm:$0xff]
                %1039 = vst [vmem:[%s1033 + $0x20] sm:$0xff] %v1038
                %v1040 = vld [vmem:[%s1032 + $0x18] sm:$0xff]
                %1041 = vst [vmem:[%s1033 + $0x30] sm:$0xff] %v1040
                %v1042 = vld [vmem:[%s1032 + $0x20] sm:$0xff]
                %1043 = vst [vmem:[%s1033 + $0x40] sm:$0xff] %v1042
                %v1044 = vld [vmem:[%s1032 + $0x28] sm:$0xff]
                %1045 = vst [vmem:[%s1033 + $0x50] sm:$0xff] %v1044
                %v1046 = vld [vmem:[%s1032 + $0x30] sm:$0xff]
                %1047 = vst [vmem:[%s1033 + $0x60] sm:$0xff] %v1046
                %v1048 = vld [vmem:[%s1032 + $0x38] sm:$0xff]
                %1049 = vst [vmem:[%s1033 + $0x70] sm:$0xff] %v1048
              $region152: #{rnnbase_forward.1} parent=146 // loop_footer
                %s1031 = sadd.s32 1, %s1027
              $region153: #{rnnbase_forward.1} parent=146 // loop_footer_branch
                %1026 = sbr.rel target = $region149
              $region154: #{rnnbase_forward.1} parent=146 // loop_exit
                _
            $region147: #{rnnbase_forward.1} parent=138 // pred_fallthru
              _
          $region139: #{rnnbase_forward.1} parent=134 // pred_fallthru
            _
          %1078 = vnop
        $region135: #{rnnbase_forward.1} parent=77 // pred_fallthru
          _
      $region78: #{rnnbase_forward.1} parent=5 // pred_fallthru
        _
      %p1079 = scmp.le.s32.totalorder 2, %s14
      // Predicated region
      $region170: #{rnnbase_forward.1} parent=5 // pred_check
        %p1080 = pneg %p1079
      $region171: #{rnnbase_forward.1} parent=5 // pred_check_branch
        %1082 = sbr.rel (%p1080) target = $region173
      $region172: #{rnnbase_forward.1} parent=5 // pred_region
        %s1083 = ssub.s32 %s14, 2
        // Predicated region
        $region174: #{rnnbase_forward.1} parent=172 // pred_check
          %p1084 = pneg %p190
        $region175: #{rnnbase_forward.1} parent=172 // pred_check_branch
          %1086 = sbr.rel (%p1084) target = $region177
        $region176: #{rnnbase_forward.1} parent=172 // pred_region
          %s1087 = sand.u32 %s175, 1
          %s1088 = sand.u32 %s175, 1
          %s1089 = smul.addr %s1088, 64
          %s1090 = scalar_lea.vmem [#allocation6], %s1089
        $region177: #{rnnbase_forward.1} parent=172 // pred_fallthru
          _
        // Predicated region
        $region178: #{rnnbase_forward.1} parent=172 // pred_check
          %p1091 = pneg %p218
        $region179: #{rnnbase_forward.1} parent=172 // pred_check_branch
          %1093 = sbr.rel (%p1091) target = $region181
        $region180: #{rnnbase_forward.1} parent=172 // pred_region
          %s1094 = sand.u32 %s203, 1
          %s1095 = sand.u32 %s203, 1
          %s1096 = smul.addr %s1095, 64
          %s1097 = scalar_lea.vmem [#allocation7], %s1096
        $region181: #{rnnbase_forward.1} parent=172 // pred_fallthru
          _
      $region173: #{rnnbase_forward.1} parent=5 // pred_fallthru
        _
    $region6: #{rnnbase_forward.1} parent=1 // loop_footer
      %s18 = sadd.s32 1, %s14
    $region7: #{rnnbase_forward.1} parent=1 // loop_footer_branch
      %13 = sbr.rel target = $region3
    $region8: #{rnnbase_forward.1} parent=1 // loop_exit
      _

</llo_original>
